<compile_context>
chip_gen: v5e
topology: v5e:2x2
jax: 0.10.0
libtpu: 0.0.40
codegen_flags: <defaults>
</compile_context>

<pallas_src>
import math

import jax
import jax.numpy as jnp
import numpy as np
from jax.experimental import pallas as pl
from jax.experimental.pallas import tpu as pltpu

# ---- small, architecture-consistent sizes (scaled-down ParaModel) ----
B = 2           # batch
S = 16          # sequence length
H = 128         # hidden_size
HEADS = 4       # attention_heads
DHEAD = 64      # attention_dim
DPAD = 128      # per-head lanes after zero-padding (vreg-aligned head slices)
HD = HEADS * DHEAD    # heads * head_dim (need not equal H, as in the torch model)
F = 256         # fnn_dim
LN_EPS = 1e-5   # torch nn.LayerNorm default


def _layernorm(x, gamma, beta):
    # x: (B*S, H) f32; gamma/beta: (1, H) f32. One-pass variance.
    mean = jnp.mean(x, axis=-1, keepdims=True)
    mean_sq = jnp.mean(x * x, axis=-1, keepdims=True)
    var = mean_sq - mean * mean
    inv = jax.lax.rsqrt(var + LN_EPS)
    return (x - mean) * inv * gamma + beta


def decode_layer_kernel(x_ref, bias_ref,
                        wq_ref, wk_ref, wv_ref, wo_ref,
                        ln1_g_ref, ln1_b_ref,
                        w1_ref, w2_ref,
                        ln2_g_ref, ln2_b_ref,
                        out_ref, scores_ref):
    x = x_ref[...]                                  # (B*S, H) f32
    x_bf = x.astype(jnp.bfloat16)

    # QKV projections for all batches / heads at once (bf16 in, f32 acc).
    # 1/sqrt(DHEAD) is already folded into wq; heads are padded to 128 lanes.
    q = jnp.dot(x_bf, wq_ref[...], preferred_element_type=jnp.float32)
    k = jnp.dot(x_bf, wk_ref[...], preferred_element_type=jnp.float32)
    v = jnp.dot(x_bf, wv_ref[...], preferred_element_type=jnp.float32)
    q_bf = q.astype(jnp.bfloat16)                   # (B*S, HEADS*DPAD)
    k_bf = k.astype(jnp.bfloat16)
    v_bf = v.astype(jnp.bfloat16)

    ctx_rows = []
    for b in range(B):                              # static unrolled (tiny tiles)
        bias_b = bias_ref[b]                        # (S, S) f32 additive mask
        r0 = b * S
        head_ctx = []
        for h in range(HEADS):
            c0 = h * DPAD                           # 128-lane aligned slice
            qh = q_bf[r0:r0 + S, c0:c0 + DPAD]
            kh = k_bf[r0:r0 + S, c0:c0 + DPAD]
            vh = v_bf[r0:r0 + S, c0:c0 + DPAD]

            # Scores: contract last dims of q and k directly (no kh.T).
            # Padded lanes are zero in both operands -> identical result.
            s = jax.lax.dot_general(qh, kh, (((1,), (1,)), ((), ())),
                                    preferred_element_type=jnp.float32)  # (S,S)
            s = s + bias_b                          # masked_fill_ as additive bias

            m = jnp.max(s, axis=-1, keepdims=True)
            e = jnp.exp(s - m)
            denom = jnp.sum(e, axis=-1, keepdims=True)
            p = e * pl.reciprocal(denom, approx=True)   # EUP vrcp

            # Store this softmax tile immediately (no live 8-tile list).
            idx = b * HEADS + h
            scores_ref[:, idx * S:(idx + 1) * S] = p

            head_ctx.append(jnp.dot(p.astype(jnp.bfloat16), vh,
                                    preferred_element_type=jnp.float32))  # (S, DPAD)
        ctx_rows.append(jnp.concatenate(head_ctx, axis=-1))   # (S, HEADS*DPAD)
    ctx = jnp.concatenate(ctx_rows, axis=0)                    # (B*S, HEADS*DPAD)

    # Output projection (wo rows zero-padded to match ctx padding), residual + LN.
    attn_out = jnp.dot(ctx.astype(jnp.bfloat16), wo_ref[...],
                       preferred_element_type=jnp.float32)     # (B*S, H)
    y = _layernorm(attn_out + x, ln1_g_ref[...], ln1_b_ref[...])

    # FFN: Linear -> ReLU -> Linear, residual, LN.
    h1 = jnp.maximum(jnp.dot(y.astype(jnp.bfloat16), w1_ref[...],
                             preferred_element_type=jnp.float32), 0.0)
    h2 = jnp.dot(h1.astype(jnp.bfloat16), w2_ref[...],
                 preferred_element_type=jnp.float32)
    out_ref[...] = _layernorm(y + h2, ln2_g_ref[...], ln2_b_ref[...])


@jax.jit
def decode_layer(x, mask, wq, wk, wv, wo, ln1_g, ln1_b, w1, w2, ln2_g, ln2_b):
    x2 = x.reshape(B * S, H)                        # flatten batch into sublanes
    bias = mask.astype(jnp.float32) * jnp.float32(-1e9)

    pad = DPAD - DHEAD
    # Fold 1/sqrt(DHEAD) into wq; zero-pad each head to 128 lanes; cast bf16.
    wq_p = jnp.pad((wq * jnp.float32(1.0 / math.sqrt(DHEAD))).reshape(H, HEADS, DHEAD),
                   ((0, 0), (0, 0), (0, pad))).reshape(H, HEADS * DPAD).astype(jnp.bfloat16)
    wk_p = jnp.pad(wk.reshape(H, HEADS, DHEAD),
                   ((0, 0), (0, 0), (0, pad))).reshape(H, HEADS * DPAD).astype(jnp.bfloat16)
    wv_p = jnp.pad(wv.reshape(H, HEADS, DHEAD),
                   ((0, 0), (0, 0), (0, pad))).reshape(H, HEADS * DPAD).astype(jnp.bfloat16)
    wo_p = jnp.pad(wo.reshape(HEADS, DHEAD, H),
                   ((0, 0), (0, pad), (0, 0))).reshape(HEADS * DPAD, H).astype(jnp.bfloat16)
    w1_b = w1.astype(jnp.bfloat16)
    w2_b = w2.astype(jnp.bfloat16)

    def _full(shape):
        nd = len(shape)
        return pl.BlockSpec(shape, lambda i, _nd=nd: (0,) * _nd)

    out_shape = (
        jax.ShapeDtypeStruct((B * S, H), jnp.float32),          # output rows
        jax.ShapeDtypeStruct((S, B * HEADS * S), jnp.float32),  # lane-dense scores
    )
    grid_spec = pltpu.PrefetchScalarGridSpec(
        num_scalar_prefetch=0,
        grid=(1,),                      # single step: no per-batch pipeline overhead
        in_specs=[
            _full((B * S, H)),          # x (flattened)
            _full((B, S, S)),           # additive mask bias (f32)
            _full((H, HEADS * DPAD)),   # wq (scaled, head-padded, bf16)
            _full((H, HEADS * DPAD)),   # wk
            _full((H, HEADS * DPAD)),   # wv
            _full((HEADS * DPAD, H)),   # wo (row-padded, bf16)
            _full((1, H)),              # ln1 gamma
            _full((1, H)),              # ln1 beta
            _full((H, F)),              # fnn w1 (bf16)
            _full((F, H)),              # fnn w2 (bf16)
            _full((1, H)),              # ln2 gamma
            _full((1, H)),              # ln2 beta
        ],
        out_specs=[
            _full((B * S, H)),
            _full((S, B * HEADS * S)),
        ],
    )
    out2, scores_wide = pl.pallas_call(
        decode_layer_kernel,
        out_shape=out_shape,
        grid_spec=grid_spec,
        compiler_params=pltpu.CompilerParams(
            dimension_semantics=("arbitrary",)),
    )(x2, bias, wq_p, wk_p, wv_p, wo_p, ln1_g, ln1_b, w1_b, w2_b, ln2_g, ln2_b)

    out = out2.reshape(B, S, H)
    # (S, B*HEADS*S) -> (B, HEADS, S, S): wrapper-side layout plumbing.
    scores = scores_wide.reshape(S, B, HEADS, S).transpose(1, 2, 0, 3)
    return out, scores


def reference_decode_layer(x, mask, wq, wk, wv, wo, ln1_g, ln1_b, w1, w2, ln2_g, ln2_b):
    """Exact float64 numpy reference matching the torch module semantics."""
    f = lambda a: np.asarray(a, dtype=np.float64)
    x, wq, wk, wv, wo, w1, w2 = map(f, (x, wq, wk, wv, wo, w1, w2))
    ln1_g, ln1_b, ln2_g, ln2_b = map(f, (ln1_g, ln1_b, ln2_g, ln2_b))
    mask = np.asarray(mask)

    def ln(v, g, b):
        mu = v.mean(-1, keepdims=True)
        var = ((v - mu) ** 2).mean(-1, keepdims=True)
        return (v - mu) / np.sqrt(var + LN_EPS) * g + b

    q = (x @ wq).reshape(B, S, HEADS, DHEAD).transpose(0, 2, 1, 3)
    k = (x @ wk).reshape(B, S, HEADS, DHEAD).transpose(0, 2, 1, 3)
    v = (x @ wv).reshape(B, S, HEADS, DHEAD).transpose(0, 2, 1, 3)
    s = q @ k.transpose(0, 1, 3, 2) / math.sqrt(DHEAD)
    s = np.where(mask[:, None, :, :] != 0, -1e9, s)      # masked_fill_
    e = np.exp(s - s.max(-1, keepdims=True))
    p = e / e.sum(-1, keepdims=True)
    att = (p @ v).transpose(0, 2, 1, 3).reshape(B, S, HD)
    y = ln(att @ wo + x, ln1_g[0], ln1_b[0])
    ff = np.maximum(y @ w1, 0.0) @ w2
    out = ln(y + ff, ln2_g[0], ln2_b[0])
    return out, p


if __name__ == "__main__":
    key = jax.random.PRNGKey(0)
    ks = jax.random.split(key, 9)

    x = jax.random.normal(ks[0], (B, S, H), dtype=jnp.float32)
    # Causal mask (1 = masked future position), same role as torch's bool atten_masks.
    causal = np.triu(np.ones((S, S), dtype=np.int32), k=1)
    mask = jnp.broadcast_to(jnp.asarray(causal), (B, S, S))

    scale_h = 1.0 / math.sqrt(H)
    scale_hd = 1.0 / math.sqrt(HD)
    scale_f = 1.0 / math.sqrt(F)
    wq = jax.random.normal(ks[1], (H, HD), dtype=jnp.float32) * scale_h
    wk = jax.random.normal(ks[2], (H, HD), dtype=jnp.float32) * scale_h
    wv = jax.random.normal(ks[3], (H, HD), dtype=jnp.float32) * scale_h
    wo = jax.random.normal(ks[4], (HD, H), dtype=jnp.float32) * scale_hd
    w1 = jax.random.normal(ks[5], (H, F), dtype=jnp.float32) * scale_h
    w2 = jax.random.normal(ks[6], (F, H), dtype=jnp.float32) * scale_f
    ln1_g = jnp.ones((1, H), jnp.float32)
    ln1_b = jnp.zeros((1, H), jnp.float32)
    ln2_g = jnp.ones((1, H), jnp.float32)
    ln2_b = jnp.zeros((1, H), jnp.float32)

    out, scores = decode_layer(x, mask, wq, wk, wv, wo,
                               ln1_g, ln1_b, w1, w2, ln2_g, ln2_b)
    out = jax.block_until_ready(out)
    scores = jax.block_until_ready(scores)

    ref_out, ref_scores = reference_decode_layer(
        x, mask, wq, wk, wv, wo, ln1_g, ln1_b, w1, w2, ln2_g, ln2_b)

    # Tolerances sized for bf16 matmul operands (f32 accumulation) against an
    # exact float64 reference.
    assert np.allclose(np.asarray(out, np.float64), ref_out, atol=4e-2, rtol=4e-2), \
        f"out max abs diff {np.abs(np.asarray(out, np.float64) - ref_out).max()}"
    assert np.allclose(np.asarray(scores, np.float64), ref_scores, atol=2e-2, rtol=2e-2), \
        f"scores max abs diff {np.abs(np.asarray(scores, np.float64) - ref_scores).max()}"

    print("KERNEL_OK")
</pallas_src>

<mosaic_0001>
module attributes {stable_mosaic.version = 11 : i64} {
  func.func @decode_layer_kernel(%arg0: i32, %arg1: memref<32x128xf32, #tpu.memory_space<vmem>>, %arg2: memref<2x16x16xf32, #tpu.memory_space<vmem>>, %arg3: memref<128x512xbf16, #tpu.memory_space<vmem>>, %arg4: memref<128x512xbf16, #tpu.memory_space<vmem>>, %arg5: memref<128x512xbf16, #tpu.memory_space<vmem>>, %arg6: memref<512x128xbf16, #tpu.memory_space<vmem>>, %arg7: memref<1x128xf32, #tpu.memory_space<vmem>>, %arg8: memref<1x128xf32, #tpu.memory_space<vmem>>, %arg9: memref<128x256xbf16, #tpu.memory_space<vmem>>, %arg10: memref<256x128xbf16, #tpu.memory_space<vmem>>, %arg11: memref<1x128xf32, #tpu.memory_space<vmem>>, %arg12: memref<1x128xf32, #tpu.memory_space<vmem>>, %arg13: memref<32x128xf32, #tpu.memory_space<vmem>>, %arg14: memref<16x128xf32, #tpu.memory_space<vmem>>) attributes {dimension_semantics = [#tpu.dimension_semantics<arbitrary>], iteration_bounds = array<i64: 1>, scalar_prefetch = 0 : i64, scratch_operands = 0 : i64, tpu.core_type = #tpu.core_type<tc>, window_params = [{pipeline_mode = #tpu.pipeline_mode<synchronous>, transform_indices = @transform_0, window_bounds = array<i64: 32, 128>}, {pipeline_mode = #tpu.pipeline_mode<synchronous>, transform_indices = @transform_1, window_bounds = array<i64: 2, 16, 16>}, {pipeline_mode = #tpu.pipeline_mode<synchronous>, transform_indices = @transform_2, window_bounds = array<i64: 128, 512>}, {pipeline_mode = #tpu.pipeline_mode<synchronous>, transform_indices = @transform_3, window_bounds = array<i64: 128, 512>}, {pipeline_mode = #tpu.pipeline_mode<synchronous>, transform_indices = @transform_4, window_bounds = array<i64: 128, 512>}, {pipeline_mode = #tpu.pipeline_mode<synchronous>, transform_indices = @transform_5, window_bounds = array<i64: 512, 128>}, {pipeline_mode = #tpu.pipeline_mode<synchronous>, transform_indices = @transform_6, window_bounds = array<i64: 1, 128>}, {pipeline_mode = #tpu.pipeline_mode<synchronous>, transform_indices = @transform_7, window_bounds = array<i64: 1, 128>}, {pipeline_mode = #tpu.pipeline_mode<synchronous>, transform_indices = @transform_8, window_bounds = array<i64: 128, 256>}, {pipeline_mode = #tpu.pipeline_mode<synchronous>, transform_indices = @transform_9, window_bounds = array<i64: 256, 128>}, {pipeline_mode = #tpu.pipeline_mode<synchronous>, transform_indices = @transform_10, window_bounds = array<i64: 1, 128>}, {pipeline_mode = #tpu.pipeline_mode<synchronous>, transform_indices = @transform_11, window_bounds = array<i64: 1, 128>}, {pipeline_mode = #tpu.pipeline_mode<synchronous>, transform_indices = @transform_12, window_bounds = array<i64: 32, 128>}, {pipeline_mode = #tpu.pipeline_mode<synchronous>, transform_indices = @transform_13, window_bounds = array<i64: 16, 128>}]} {
    %c0 = arith.constant 0 : index
    %c0_0 = arith.constant 0 : index
    %0 = vector.load %arg1[%c0, %c0_0] : memref<32x128xf32, #tpu.memory_space<vmem>>, vector<32x128xf32>
    %1 = arith.truncf %0 : vector<32x128xf32> to vector<32x128xbf16>
    %c0_1 = arith.constant 0 : index
    %c0_2 = arith.constant 0 : index
    %2 = vector.load %arg3[%c0_1, %c0_2] : memref<128x512xbf16, #tpu.memory_space<vmem>>, vector<128x512xbf16>
    %cst = arith.constant dense<0.000000e+00> : vector<32x512xf32>
    %3 = tpu.matmul %1, %2, %cst {dimension_numbers = #tpu.dot_dimension_numbers<[1], [0], [0], [1], [0, 0, 1, 1], [], []>} : vector<32x128xbf16>, vector<128x512xbf16>, vector<32x512xf32> -> vector<32x512xf32>
    %c0_3 = arith.constant 0 : index
    %c0_4 = arith.constant 0 : index
    %4 = vector.load %arg4[%c0_3, %c0_4] : memref<128x512xbf16, #tpu.memory_space<vmem>>, vector<128x512xbf16>
    %cst_5 = arith.constant dense<0.000000e+00> : vector<32x512xf32>
    %5 = tpu.matmul %1, %4, %cst_5 {dimension_numbers = #tpu.dot_dimension_numbers<[1], [0], [0], [1], [0, 0, 1, 1], [], []>} : vector<32x128xbf16>, vector<128x512xbf16>, vector<32x512xf32> -> vector<32x512xf32>
    %c0_6 = arith.constant 0 : index
    %c0_7 = arith.constant 0 : index
    %6 = vector.load %arg5[%c0_6, %c0_7] : memref<128x512xbf16, #tpu.memory_space<vmem>>, vector<128x512xbf16>
    %cst_8 = arith.constant dense<0.000000e+00> : vector<32x512xf32>
    %7 = tpu.matmul %1, %6, %cst_8 {dimension_numbers = #tpu.dot_dimension_numbers<[1], [0], [0], [1], [0, 0, 1, 1], [], []>} : vector<32x128xbf16>, vector<128x512xbf16>, vector<32x512xf32> -> vector<32x512xf32>
    %8 = arith.truncf %3 : vector<32x512xf32> to vector<32x512xbf16>
    %9 = arith.truncf %5 : vector<32x512xf32> to vector<32x512xbf16>
    %10 = arith.truncf %7 : vector<32x512xf32> to vector<32x512xbf16>
    %c0_9 = arith.constant 0 : index
    %c0_10 = arith.constant 0 : index
    %c0_11 = arith.constant 0 : index
    %11 = vector.load %arg2[%c0_9, %c0_10, %c0_11] : memref<2x16x16xf32, #tpu.memory_space<vmem>>, vector<1x16x16xf32>
    %12 = vector.shape_cast %11 : vector<1x16x16xf32> to vector<16x16xf32>
    %13 = vector.extract_strided_slice %8 {offsets = [0, 0], sizes = [16, 128], strides = [1, 1]} : vector<32x512xbf16> to vector<16x128xbf16>
    %14 = vector.extract_strided_slice %9 {offsets = [0, 0], sizes = [16, 128], strides = [1, 1]} : vector<32x512xbf16> to vector<16x128xbf16>
    %15 = vector.extract_strided_slice %10 {offsets = [0, 0], sizes = [16, 128], strides = [1, 1]} : vector<32x512xbf16> to vector<16x128xbf16>
    %cst_12 = arith.constant dense<0.000000e+00> : vector<16x16xf32>
    %16 = tpu.matmul %13, %14, %cst_12 {dimension_numbers = #tpu.dot_dimension_numbers<[1], [1], [0], [0], [0, 0, 1, 0], [], []>} : vector<16x128xbf16>, vector<16x128xbf16>, vector<16x16xf32> -> vector<16x16xf32>
    %17 = arith.addf %16, %12 : vector<16x16xf32>
    %cst_13 = arith.constant dense<0xFF800000> : vector<16xf32>
    %18 = vector.multi_reduction <maximumf>, %17, %cst_13 [1] : vector<16x16xf32> to vector<16xf32>
    %19 = vector.shape_cast %18 : vector<16xf32> to vector<16x1xf32>
    %20 = vector.broadcast %19 : vector<16x1xf32> to vector<16x16xf32>
    %21 = arith.subf %17, %20 : vector<16x16xf32>
    %22 = math.exp %21 : vector<16x16xf32>
    %cst_14 = arith.constant dense<0.000000e+00> : vector<16xf32>
    %23 = vector.multi_reduction <add>, %22, %cst_14 [1] : vector<16x16xf32> to vector<16xf32>
    %24 = vector.shape_cast %23 : vector<16xf32> to vector<16x1xf32>
    %25 = tpu.reciprocal %24 {approx = true} : vector<16x1xf32> -> vector<16x1xf32>
    %26 = vector.broadcast %25 : vector<16x1xf32> to vector<16x16xf32>
    %27 = arith.mulf %22, %26 : vector<16x16xf32>
    %c0_15 = arith.constant 0 : index
    %c0_16 = arith.constant 0 : index
    %28 = vector.load %arg14[%c0_15, %c0_16] : memref<16x128xf32, #tpu.memory_space<vmem>>, vector<16x16xf32>
    tpu.vector_store %arg14[%c0_15, %c0_16], %27 {strides = array<i32>} : memref<16x128xf32, #tpu.memory_space<vmem>>, vector<16x16xf32>,
    %29 = arith.truncf %27 : vector<16x16xf32> to vector<16x16xbf16>
    %cst_17 = arith.constant dense<0.000000e+00> : vector<16x128xf32>
    %30 = tpu.matmul %29, %15, %cst_17 {dimension_numbers = #tpu.dot_dimension_numbers<[1], [0], [0], [1], [0, 0, 1, 1], [], []>} : vector<16x16xbf16>, vector<16x128xbf16>, vector<16x128xf32> -> vector<16x128xf32>
    %31 = vector.extract_strided_slice %8 {offsets = [0, 128], sizes = [16, 128], strides = [1, 1]} : vector<32x512xbf16> to vector<16x128xbf16>
    %32 = vector.extract_strided_slice %9 {offsets = [0, 128], sizes = [16, 128], strides = [1, 1]} : vector<32x512xbf16> to vector<16x128xbf16>
    %33 = vector.extract_strided_slice %10 {offsets = [0, 128], sizes = [16, 128], strides = [1, 1]} : vector<32x512xbf16> to vector<16x128xbf16>
    %cst_18 = arith.constant dense<0.000000e+00> : vector<16x16xf32>
    %34 = tpu.matmul %31, %32, %cst_18 {dimension_numbers = #tpu.dot_dimension_numbers<[1], [1], [0], [0], [0, 0, 1, 0], [], []>} : vector<16x128xbf16>, vector<16x128xbf16>, vector<16x16xf32> -> vector<16x16xf32>
    %35 = arith.addf %34, %12 : vector<16x16xf32>
    %cst_19 = arith.constant dense<0xFF800000> : vector<16xf32>
    %36 = vector.multi_reduction <maximumf>, %35, %cst_19 [1] : vector<16x16xf32> to vector<16xf32>
    %37 = vector.shape_cast %36 : vector<16xf32> to vector<16x1xf32>
    %38 = vector.broadcast %37 : vector<16x1xf32> to vector<16x16xf32>
    %39 = arith.subf %35, %38 : vector<16x16xf32>
    %40 = math.exp %39 : vector<16x16xf32>
    %cst_20 = arith.constant dense<0.000000e+00> : vector<16xf32>
    %41 = vector.multi_reduction <add>, %40, %cst_20 [1] : vector<16x16xf32> to vector<16xf32>
    %42 = vector.shape_cast %41 : vector<16xf32> to vector<16x1xf32>
    %43 = tpu.reciprocal %42 {approx = true} : vector<16x1xf32> -> vector<16x1xf32>
    %44 = vector.broadcast %43 : vector<16x1xf32> to vector<16x16xf32>
    %45 = arith.mulf %40, %44 : vector<16x16xf32>
    %c0_21 = arith.constant 0 : index
    %c16 = arith.constant 16 : index
    %46 = vector.load %arg14[%c0_21, %c16] : memref<16x128xf32, #tpu.memory_space<vmem>>, vector<16x16xf32>
    tpu.vector_store %arg14[%c0_21, %c16], %45 {strides = array<i32>} : memref<16x128xf32, #tpu.memory_space<vmem>>, vector<16x16xf32>,
    %47 = arith.truncf %45 : vector<16x16xf32> to vector<16x16xbf16>
    %cst_22 = arith.constant dense<0.000000e+00> : vector<16x128xf32>
    %48 = tpu.matmul %47, %33, %cst_22 {dimension_numbers = #tpu.dot_dimension_numbers<[1], [0], [0], [1], [0, 0, 1, 1], [], []>} : vector<16x16xbf16>, vector<16x128xbf16>, vector<16x128xf32> -> vector<16x128xf32>
    %49 = vector.extract_strided_slice %8 {offsets = [0, 256], sizes = [16, 128], strides = [1, 1]} : vector<32x512xbf16> to vector<16x128xbf16>
    %50 = vector.extract_strided_slice %9 {offsets = [0, 256], sizes = [16, 128], strides = [1, 1]} : vector<32x512xbf16> to vector<16x128xbf16>
    %51 = vector.extract_strided_slice %10 {offsets = [0, 256], sizes = [16, 128], strides = [1, 1]} : vector<32x512xbf16> to vector<16x128xbf16>
    %cst_23 = arith.constant dense<0.000000e+00> : vector<16x16xf32>
    %52 = tpu.matmul %49, %50, %cst_23 {dimension_numbers = #tpu.dot_dimension_numbers<[1], [1], [0], [0], [0, 0, 1, 0], [], []>} : vector<16x128xbf16>, vector<16x128xbf16>, vector<16x16xf32> -> vector<16x16xf32>
    %53 = arith.addf %52, %12 : vector<16x16xf32>
    %cst_24 = arith.constant dense<0xFF800000> : vector<16xf32>
    %54 = vector.multi_reduction <maximumf>, %53, %cst_24 [1] : vector<16x16xf32> to vector<16xf32>
    %55 = vector.shape_cast %54 : vector<16xf32> to vector<16x1xf32>
    %56 = vector.broadcast %55 : vector<16x1xf32> to vector<16x16xf32>
    %57 = arith.subf %53, %56 : vector<16x16xf32>
    %58 = math.exp %57 : vector<16x16xf32>
    %cst_25 = arith.constant dense<0.000000e+00> : vector<16xf32>
    %59 = vector.multi_reduction <add>, %58, %cst_25 [1] : vector<16x16xf32> to vector<16xf32>
    %60 = vector.shape_cast %59 : vector<16xf32> to vector<16x1xf32>
    %61 = tpu.reciprocal %60 {approx = true} : vector<16x1xf32> -> vector<16x1xf32>
    %62 = vector.broadcast %61 : vector<16x1xf32> to vector<16x16xf32>
    %63 = arith.mulf %58, %62 : vector<16x16xf32>
    %c0_26 = arith.constant 0 : index
    %c32 = arith.constant 32 : index
    %64 = vector.load %arg14[%c0_26, %c32] : memref<16x128xf32, #tpu.memory_space<vmem>>, vector<16x16xf32>
    tpu.vector_store %arg14[%c0_26, %c32], %63 {strides = array<i32>} : memref<16x128xf32, #tpu.memory_space<vmem>>, vector<16x16xf32>,
    %65 = arith.truncf %63 : vector<16x16xf32> to vector<16x16xbf16>
    %cst_27 = arith.constant dense<0.000000e+00> : vector<16x128xf32>
    %66 = tpu.matmul %65, %51, %cst_27 {dimension_numbers = #tpu.dot_dimension_numbers<[1], [0], [0], [1], [0, 0, 1, 1], [], []>} : vector<16x16xbf16>, vector<16x128xbf16>, vector<16x128xf32> -> vector<16x128xf32>
    %67 = vector.extract_strided_slice %8 {offsets = [0, 384], sizes = [16, 128], strides = [1, 1]} : vector<32x512xbf16> to vector<16x128xbf16>
    %68 = vector.extract_strided_slice %9 {offsets = [0, 384], sizes = [16, 128], strides = [1, 1]} : vector<32x512xbf16> to vector<16x128xbf16>
    %69 = vector.extract_strided_slice %10 {offsets = [0, 384], sizes = [16, 128], strides = [1, 1]} : vector<32x512xbf16> to vector<16x128xbf16>
    %cst_28 = arith.constant dense<0.000000e+00> : vector<16x16xf32>
    %70 = tpu.matmul %67, %68, %cst_28 {dimension_numbers = #tpu.dot_dimension_numbers<[1], [1], [0], [0], [0, 0, 1, 0], [], []>} : vector<16x128xbf16>, vector<16x128xbf16>, vector<16x16xf32> -> vector<16x16xf32>
    %71 = arith.addf %70, %12 : vector<16x16xf32>
    %cst_29 = arith.constant dense<0xFF800000> : vector<16xf32>
    %72 = vector.multi_reduction <maximumf>, %71, %cst_29 [1] : vector<16x16xf32> to vector<16xf32>
    %73 = vector.shape_cast %72 : vector<16xf32> to vector<16x1xf32>
    %74 = vector.broadcast %73 : vector<16x1xf32> to vector<16x16xf32>
    %75 = arith.subf %71, %74 : vector<16x16xf32>
    %76 = math.exp %75 : vector<16x16xf32>
    %cst_30 = arith.constant dense<0.000000e+00> : vector<16xf32>
    %77 = vector.multi_reduction <add>, %76, %cst_30 [1] : vector<16x16xf32> to vector<16xf32>
    %78 = vector.shape_cast %77 : vector<16xf32> to vector<16x1xf32>
    %79 = tpu.reciprocal %78 {approx = true} : vector<16x1xf32> -> vector<16x1xf32>
    %80 = vector.broadcast %79 : vector<16x1xf32> to vector<16x16xf32>
    %81 = arith.mulf %76, %80 : vector<16x16xf32>
    %c0_31 = arith.constant 0 : index
    %c48 = arith.constant 48 : index
    %82 = vector.load %arg14[%c0_31, %c48] : memref<16x128xf32, #tpu.memory_space<vmem>>, vector<16x16xf32>
    tpu.vector_store %arg14[%c0_31, %c48], %81 {strides = array<i32>} : memref<16x128xf32, #tpu.memory_space<vmem>>, vector<16x16xf32>,
    %83 = arith.truncf %81 : vector<16x16xf32> to vector<16x16xbf16>
    %cst_32 = arith.constant dense<0.000000e+00> : vector<16x128xf32>
    %84 = tpu.matmul %83, %69, %cst_32 {dimension_numbers = #tpu.dot_dimension_numbers<[1], [0], [0], [1], [0, 0, 1, 1], [], []>} : vector<16x16xbf16>, vector<16x128xbf16>, vector<16x128xf32> -> vector<16x128xf32>
    %85 = tpu.concatenate %30, %48, %66, %84 in 1 : vector<16x128xf32>, vector<16x128xf32>, vector<16x128xf32>, vector<16x128xf32> -> vector<16x512xf32>
    %c1 = arith.constant 1 : index
    %c0_33 = arith.constant 0 : index
    %c0_34 = arith.constant 0 : index
    %86 = vector.load %arg2[%c1, %c0_33, %c0_34] : memref<2x16x16xf32, #tpu.memory_space<vmem>>, vector<1x16x16xf32>
    %87 = vector.shape_cast %86 : vector<1x16x16xf32> to vector<16x16xf32>
    %88 = vector.extract_strided_slice %8 {offsets = [16, 0], sizes = [16, 128], strides = [1, 1]} : vector<32x512xbf16> to vector<16x128xbf16>
    %89 = vector.extract_strided_slice %9 {offsets = [16, 0], sizes = [16, 128], strides = [1, 1]} : vector<32x512xbf16> to vector<16x128xbf16>
    %90 = vector.extract_strided_slice %10 {offsets = [16, 0], sizes = [16, 128], strides = [1, 1]} : vector<32x512xbf16> to vector<16x128xbf16>
    %cst_35 = arith.constant dense<0.000000e+00> : vector<16x16xf32>
    %91 = tpu.matmul %88, %89, %cst_35 {dimension_numbers = #tpu.dot_dimension_numbers<[1], [1], [0], [0], [0, 0, 1, 0], [], []>} : vector<16x128xbf16>, vector<16x128xbf16>, vector<16x16xf32> -> vector<16x16xf32>
    %92 = arith.addf %91, %87 : vector<16x16xf32>
    %cst_36 = arith.constant dense<0xFF800000> : vector<16xf32>
    %93 = vector.multi_reduction <maximumf>, %92, %cst_36 [1] : vector<16x16xf32> to vector<16xf32>
    %94 = vector.shape_cast %93 : vector<16xf32> to vector<16x1xf32>
    %95 = vector.broadcast %94 : vector<16x1xf32> to vector<16x16xf32>
    %96 = arith.subf %92, %95 : vector<16x16xf32>
    %97 = math.exp %96 : vector<16x16xf32>
    %cst_37 = arith.constant dense<0.000000e+00> : vector<16xf32>
    %98 = vector.multi_reduction <add>, %97, %cst_37 [1] : vector<16x16xf32> to vector<16xf32>
    %99 = vector.shape_cast %98 : vector<16xf32> to vector<16x1xf32>
    %100 = tpu.reciprocal %99 {approx = true} : vector<16x1xf32> -> vector<16x1xf32>
    %101 = vector.broadcast %100 : vector<16x1xf32> to vector<16x16xf32>
    %102 = arith.mulf %97, %101 : vector<16x16xf32>
    %c0_38 = arith.constant 0 : index
    %c64 = arith.constant 64 : index
    %103 = vector.load %arg14[%c0_38, %c64] : memref<16x128xf32, #tpu.memory_space<vmem>>, vector<16x16xf32>
    tpu.vector_store %arg14[%c0_38, %c64], %102 {strides = array<i32>} : memref<16x128xf32, #tpu.memory_space<vmem>>, vector<16x16xf32>,
    %104 = arith.truncf %102 : vector<16x16xf32> to vector<16x16xbf16>
    %cst_39 = arith.constant dense<0.000000e+00> : vector<16x128xf32>
    %105 = tpu.matmul %104, %90, %cst_39 {dimension_numbers = #tpu.dot_dimension_numbers<[1], [0], [0], [1], [0, 0, 1, 1], [], []>} : vector<16x16xbf16>, vector<16x128xbf16>, vector<16x128xf32> -> vector<16x128xf32>
    %106 = vector.extract_strided_slice %8 {offsets = [16, 128], sizes = [16, 128], strides = [1, 1]} : vector<32x512xbf16> to vector<16x128xbf16>
    %107 = vector.extract_strided_slice %9 {offsets = [16, 128], sizes = [16, 128], strides = [1, 1]} : vector<32x512xbf16> to vector<16x128xbf16>
    %108 = vector.extract_strided_slice %10 {offsets = [16, 128], sizes = [16, 128], strides = [1, 1]} : vector<32x512xbf16> to vector<16x128xbf16>
    %cst_40 = arith.constant dense<0.000000e+00> : vector<16x16xf32>
    %109 = tpu.matmul %106, %107, %cst_40 {dimension_numbers = #tpu.dot_dimension_numbers<[1], [1], [0], [0], [0, 0, 1, 0], [], []>} : vector<16x128xbf16>, vector<16x128xbf16>, vector<16x16xf32> -> vector<16x16xf32>
    %110 = arith.addf %109, %87 : vector<16x16xf32>
    %cst_41 = arith.constant dense<0xFF800000> : vector<16xf32>
    %111 = vector.multi_reduction <maximumf>, %110, %cst_41 [1] : vector<16x16xf32> to vector<16xf32>
    %112 = vector.shape_cast %111 : vector<16xf32> to vector<16x1xf32>
    %113 = vector.broadcast %112 : vector<16x1xf32> to vector<16x16xf32>
    %114 = arith.subf %110, %113 : vector<16x16xf32>
    %115 = math.exp %114 : vector<16x16xf32>
    %cst_42 = arith.constant dense<0.000000e+00> : vector<16xf32>
    %116 = vector.multi_reduction <add>, %115, %cst_42 [1] : vector<16x16xf32> to vector<16xf32>
    %117 = vector.shape_cast %116 : vector<16xf32> to vector<16x1xf32>
    %118 = tpu.reciprocal %117 {approx = true} : vector<16x1xf32> -> vector<16x1xf32>
    %119 = vector.broadcast %118 : vector<16x1xf32> to vector<16x16xf32>
    %120 = arith.mulf %115, %119 : vector<16x16xf32>
    %c0_43 = arith.constant 0 : index
    %c80 = arith.constant 80 : index
    %121 = vector.load %arg14[%c0_43, %c80] : memref<16x128xf32, #tpu.memory_space<vmem>>, vector<16x16xf32>
    tpu.vector_store %arg14[%c0_43, %c80], %120 {strides = array<i32>} : memref<16x128xf32, #tpu.memory_space<vmem>>, vector<16x16xf32>,
    %122 = arith.truncf %120 : vector<16x16xf32> to vector<16x16xbf16>
    %cst_44 = arith.constant dense<0.000000e+00> : vector<16x128xf32>
    %123 = tpu.matmul %122, %108, %cst_44 {dimension_numbers = #tpu.dot_dimension_numbers<[1], [0], [0], [1], [0, 0, 1, 1], [], []>} : vector<16x16xbf16>, vector<16x128xbf16>, vector<16x128xf32> -> vector<16x128xf32>
    %124 = vector.extract_strided_slice %8 {offsets = [16, 256], sizes = [16, 128], strides = [1, 1]} : vector<32x512xbf16> to vector<16x128xbf16>
    %125 = vector.extract_strided_slice %9 {offsets = [16, 256], sizes = [16, 128], strides = [1, 1]} : vector<32x512xbf16> to vector<16x128xbf16>
    %126 = vector.extract_strided_slice %10 {offsets = [16, 256], sizes = [16, 128], strides = [1, 1]} : vector<32x512xbf16> to vector<16x128xbf16>
    %cst_45 = arith.constant dense<0.000000e+00> : vector<16x16xf32>
    %127 = tpu.matmul %124, %125, %cst_45 {dimension_numbers = #tpu.dot_dimension_numbers<[1], [1], [0], [0], [0, 0, 1, 0], [], []>} : vector<16x128xbf16>, vector<16x128xbf16>, vector<16x16xf32> -> vector<16x16xf32>
    %128 = arith.addf %127, %87 : vector<16x16xf32>
    %cst_46 = arith.constant dense<0xFF800000> : vector<16xf32>
    %129 = vector.multi_reduction <maximumf>, %128, %cst_46 [1] : vector<16x16xf32> to vector<16xf32>
    %130 = vector.shape_cast %129 : vector<16xf32> to vector<16x1xf32>
    %131 = vector.broadcast %130 : vector<16x1xf32> to vector<16x16xf32>
    %132 = arith.subf %128, %131 : vector<16x16xf32>
    %133 = math.exp %132 : vector<16x16xf32>
    %cst_47 = arith.constant dense<0.000000e+00> : vector<16xf32>
    %134 = vector.multi_reduction <add>, %133, %cst_47 [1] : vector<16x16xf32> to vector<16xf32>
    %135 = vector.shape_cast %134 : vector<16xf32> to vector<16x1xf32>
    %136 = tpu.reciprocal %135 {approx = true} : vector<16x1xf32> -> vector<16x1xf32>
    %137 = vector.broadcast %136 : vector<16x1xf32> to vector<16x16xf32>
    %138 = arith.mulf %133, %137 : vector<16x16xf32>
    %c0_48 = arith.constant 0 : index
    %c96 = arith.constant 96 : index
    %139 = vector.load %arg14[%c0_48, %c96] : memref<16x128xf32, #tpu.memory_space<vmem>>, vector<16x16xf32>
    tpu.vector_store %arg14[%c0_48, %c96], %138 {strides = array<i32>} : memref<16x128xf32, #tpu.memory_space<vmem>>, vector<16x16xf32>,
    %140 = arith.truncf %138 : vector<16x16xf32> to vector<16x16xbf16>
    %cst_49 = arith.constant dense<0.000000e+00> : vector<16x128xf32>
    %141 = tpu.matmul %140, %126, %cst_49 {dimension_numbers = #tpu.dot_dimension_numbers<[1], [0], [0], [1], [0, 0, 1, 1], [], []>} : vector<16x16xbf16>, vector<16x128xbf16>, vector<16x128xf32> -> vector<16x128xf32>
    %142 = vector.extract_strided_slice %8 {offsets = [16, 384], sizes = [16, 128], strides = [1, 1]} : vector<32x512xbf16> to vector<16x128xbf16>
    %143 = vector.extract_strided_slice %9 {offsets = [16, 384], sizes = [16, 128], strides = [1, 1]} : vector<32x512xbf16> to vector<16x128xbf16>
    %144 = vector.extract_strided_slice %10 {offsets = [16, 384], sizes = [16, 128], strides = [1, 1]} : vector<32x512xbf16> to vector<16x128xbf16>
    %cst_50 = arith.constant dense<0.000000e+00> : vector<16x16xf32>
    %145 = tpu.matmul %142, %143, %cst_50 {dimension_numbers = #tpu.dot_dimension_numbers<[1], [1], [0], [0], [0, 0, 1, 0], [], []>} : vector<16x128xbf16>, vector<16x128xbf16>, vector<16x16xf32> -> vector<16x16xf32>
    %146 = arith.addf %145, %87 : vector<16x16xf32>
    %cst_51 = arith.constant dense<0xFF800000> : vector<16xf32>
    %147 = vector.multi_reduction <maximumf>, %146, %cst_51 [1] : vector<16x16xf32> to vector<16xf32>
    %148 = vector.shape_cast %147 : vector<16xf32> to vector<16x1xf32>
    %149 = vector.broadcast %148 : vector<16x1xf32> to vector<16x16xf32>
    %150 = arith.subf %146, %149 : vector<16x16xf32>
    %151 = math.exp %150 : vector<16x16xf32>
    %cst_52 = arith.constant dense<0.000000e+00> : vector<16xf32>
    %152 = vector.multi_reduction <add>, %151, %cst_52 [1] : vector<16x16xf32> to vector<16xf32>
    %153 = vector.shape_cast %152 : vector<16xf32> to vector<16x1xf32>
    %154 = tpu.reciprocal %153 {approx = true} : vector<16x1xf32> -> vector<16x1xf32>
    %155 = vector.broadcast %154 : vector<16x1xf32> to vector<16x16xf32>
    %156 = arith.mulf %151, %155 : vector<16x16xf32>
    %c0_53 = arith.constant 0 : index
    %c112 = arith.constant 112 : index
    %157 = vector.load %arg14[%c0_53, %c112] : memref<16x128xf32, #tpu.memory_space<vmem>>, vector<16x16xf32>
    tpu.vector_store %arg14[%c0_53, %c112], %156 {strides = array<i32>} : memref<16x128xf32, #tpu.memory_space<vmem>>, vector<16x16xf32>,
    %158 = arith.truncf %156 : vector<16x16xf32> to vector<16x16xbf16>
    %cst_54 = arith.constant dense<0.000000e+00> : vector<16x128xf32>
    %159 = tpu.matmul %158, %144, %cst_54 {dimension_numbers = #tpu.dot_dimension_numbers<[1], [0], [0], [1], [0, 0, 1, 1], [], []>} : vector<16x16xbf16>, vector<16x128xbf16>, vector<16x128xf32> -> vector<16x128xf32>
    %160 = tpu.concatenate %105, %123, %141, %159 in 1 : vector<16x128xf32>, vector<16x128xf32>, vector<16x128xf32>, vector<16x128xf32> -> vector<16x512xf32>
    %161 = tpu.concatenate %85, %160 in 0 : vector<16x512xf32>, vector<16x512xf32> -> vector<32x512xf32>
    %162 = arith.truncf %161 : vector<32x512xf32> to vector<32x512xbf16>
    %c0_55 = arith.constant 0 : index
    %c0_56 = arith.constant 0 : index
    %163 = vector.load %arg6[%c0_55, %c0_56] : memref<512x128xbf16, #tpu.memory_space<vmem>>, vector<512x128xbf16>
    %cst_57 = arith.constant dense<0.000000e+00> : vector<32x128xf32>
    %164 = tpu.matmul %162, %163, %cst_57 {dimension_numbers = #tpu.dot_dimension_numbers<[1], [0], [0], [1], [0, 0, 1, 1], [], []>} : vector<32x512xbf16>, vector<512x128xbf16>, vector<32x128xf32> -> vector<32x128xf32>
    %165 = arith.addf %164, %0 : vector<32x128xf32>
    %c0_58 = arith.constant 0 : index
    %c0_59 = arith.constant 0 : index
    %166 = vector.load %arg7[%c0_58, %c0_59] : memref<1x128xf32, #tpu.memory_space<vmem>>, vector<1x128xf32>
    %c0_60 = arith.constant 0 : index
    %c0_61 = arith.constant 0 : index
    %167 = vector.load %arg8[%c0_60, %c0_61] : memref<1x128xf32, #tpu.memory_space<vmem>>, vector<1x128xf32>
    %cst_62 = arith.constant dense<0.000000e+00> : vector<32xf32>
    %168 = vector.multi_reduction <add>, %165, %cst_62 [1] : vector<32x128xf32> to vector<32xf32>
    %169 = vector.shape_cast %168 : vector<32xf32> to vector<32x1xf32>
    %cst_63 = arith.constant 1.280000e+02 : f32
    %170 = vector.broadcast %cst_63 : f32 to vector<32x1xf32>
    %171 = arith.divf %169, %170 : vector<32x1xf32>
    %172 = arith.mulf %165, %165 : vector<32x128xf32>
    %cst_64 = arith.constant dense<0.000000e+00> : vector<32xf32>
    %173 = vector.multi_reduction <add>, %172, %cst_64 [1] : vector<32x128xf32> to vector<32xf32>
    %174 = vector.shape_cast %173 : vector<32xf32> to vector<32x1xf32>
    %cst_65 = arith.constant 1.280000e+02 : f32
    %175 = vector.broadcast %cst_65 : f32 to vector<32x1xf32>
    %176 = arith.divf %174, %175 : vector<32x1xf32>
    %177 = arith.mulf %171, %171 : vector<32x1xf32>
    %178 = arith.subf %176, %177 : vector<32x1xf32>
    %cst_66 = arith.constant 9.99999974E-6 : f32
    %179 = vector.broadcast %cst_66 : f32 to vector<32x1xf32>
    %180 = arith.addf %178, %179 : vector<32x1xf32>
    %181 = math.rsqrt %180 : vector<32x1xf32>
    %182 = vector.broadcast %171 : vector<32x1xf32> to vector<32x128xf32>
    %183 = arith.subf %165, %182 : vector<32x128xf32>
    %184 = vector.broadcast %181 : vector<32x1xf32> to vector<32x128xf32>
    %185 = arith.mulf %183, %184 : vector<32x128xf32>
    %186 = vector.broadcast %166 : vector<1x128xf32> to vector<32x128xf32>
    %187 = arith.mulf %185, %186 : vector<32x128xf32>
    %188 = vector.broadcast %167 : vector<1x128xf32> to vector<32x128xf32>
    %189 = arith.addf %187, %188 : vector<32x128xf32>
    %190 = arith.truncf %189 : vector<32x128xf32> to vector<32x128xbf16>
    %c0_67 = arith.constant 0 : index
    %c0_68 = arith.constant 0 : index
    %191 = vector.load %arg9[%c0_67, %c0_68] : memref<128x256xbf16, #tpu.memory_space<vmem>>, vector<128x256xbf16>
    %cst_69 = arith.constant dense<0.000000e+00> : vector<32x256xf32>
    %192 = tpu.matmul %190, %191, %cst_69 {dimension_numbers = #tpu.dot_dimension_numbers<[1], [0], [0], [1], [0, 0, 1, 1], [], []>} : vector<32x128xbf16>, vector<128x256xbf16>, vector<32x256xf32> -> vector<32x256xf32>
    %cst_70 = arith.constant 0.000000e+00 : f32
    %193 = vector.broadcast %cst_70 : f32 to vector<32x256xf32>
    %194 = arith.maximumf %192, %193 : vector<32x256xf32>
    %195 = arith.truncf %194 : vector<32x256xf32> to vector<32x256xbf16>
    %c0_71 = arith.constant 0 : index
    %c0_72 = arith.constant 0 : index
    %196 = vector.load %arg10[%c0_71, %c0_72] : memref<256x128xbf16, #tpu.memory_space<vmem>>, vector<256x128xbf16>
    %cst_73 = arith.constant dense<0.000000e+00> : vector<32x128xf32>
    %197 = tpu.matmul %195, %196, %cst_73 {dimension_numbers = #tpu.dot_dimension_numbers<[1], [0], [0], [1], [0, 0, 1, 1], [], []>} : vector<32x256xbf16>, vector<256x128xbf16>, vector<32x128xf32> -> vector<32x128xf32>
    %198 = arith.addf %189, %197 : vector<32x128xf32>
    %c0_74 = arith.constant 0 : index
    %c0_75 = arith.constant 0 : index
    %199 = vector.load %arg11[%c0_74, %c0_75] : memref<1x128xf32, #tpu.memory_space<vmem>>, vector<1x128xf32>
    %c0_76 = arith.constant 0 : index
    %c0_77 = arith.constant 0 : index
    %200 = vector.load %arg12[%c0_76, %c0_77] : memref<1x128xf32, #tpu.memory_space<vmem>>, vector<1x128xf32>
    %cst_78 = arith.constant dense<0.000000e+00> : vector<32xf32>
    %201 = vector.multi_reduction <add>, %198, %cst_78 [1] : vector<32x128xf32> to vector<32xf32>
    %202 = vector.shape_cast %201 : vector<32xf32> to vector<32x1xf32>
    %cst_79 = arith.constant 1.280000e+02 : f32
    %203 = vector.broadcast %cst_79 : f32 to vector<32x1xf32>
    %204 = arith.divf %202, %203 : vector<32x1xf32>
    %205 = arith.mulf %198, %198 : vector<32x128xf32>
    %cst_80 = arith.constant dense<0.000000e+00> : vector<32xf32>
    %206 = vector.multi_reduction <add>, %205, %cst_80 [1] : vector<32x128xf32> to vector<32xf32>
    %207 = vector.shape_cast %206 : vector<32xf32> to vector<32x1xf32>
    %cst_81 = arith.constant 1.280000e+02 : f32
    %208 = vector.broadcast %cst_81 : f32 to vector<32x1xf32>
    %209 = arith.divf %207, %208 : vector<32x1xf32>
    %210 = arith.mulf %204, %204 : vector<32x1xf32>
    %211 = arith.subf %209, %210 : vector<32x1xf32>
    %cst_82 = arith.constant 9.99999974E-6 : f32
    %212 = vector.broadcast %cst_82 : f32 to vector<32x1xf32>
    %213 = arith.addf %211, %212 : vector<32x1xf32>
    %214 = math.rsqrt %213 : vector<32x1xf32>
    %215 = vector.broadcast %204 : vector<32x1xf32> to vector<32x128xf32>
    %216 = arith.subf %198, %215 : vector<32x128xf32>
    %217 = vector.broadcast %214 : vector<32x1xf32> to vector<32x128xf32>
    %218 = arith.mulf %216, %217 : vector<32x128xf32>
    %219 = vector.broadcast %199 : vector<1x128xf32> to vector<32x128xf32>
    %220 = arith.mulf %218, %219 : vector<32x128xf32>
    %221 = vector.broadcast %200 : vector<1x128xf32> to vector<32x128xf32>
    %222 = arith.addf %220, %221 : vector<32x128xf32>
    %c0_83 = arith.constant 0 : index
    %c0_84 = arith.constant 0 : index
    %223 = vector.load %arg13[%c0_83, %c0_84] : memref<32x128xf32, #tpu.memory_space<vmem>>, vector<32x128xf32>
    tpu.vector_store %arg13[%c0_83, %c0_84], %222 {strides = array<i32>} : memref<32x128xf32, #tpu.memory_space<vmem>>, vector<32x128xf32>,
    return
  }
  func.func @transform_0(%arg0: i32) -> (i32, i32) {
    %c0_i32 = arith.constant 0 : i32
    %c0_i32_0 = arith.constant 0 : i32
    %c0_i32_1 = arith.constant 0 : i32
    return %c0_i32, %c0_i32_0 : i32, i32
  }
  func.func @transform_1(%arg0: i32) -> (i32, i32, i32) {
    %c0_i32 = arith.constant 0 : i32
    %c0_i32_0 = arith.constant 0 : i32
    %c0_i32_1 = arith.constant 0 : i32
    %c0_i32_2 = arith.constant 0 : i32
    return %c0_i32, %c0_i32_0, %c0_i32_1 : i32, i32, i32
  }
  func.func @transform_2(%arg0: i32) -> (i32, i32) {
    %c0_i32 = arith.constant 0 : i32
    %c0_i32_0 = arith.constant 0 : i32
    %c0_i32_1 = arith.constant 0 : i32
    return %c0_i32, %c0_i32_0 : i32, i32
  }
  func.func @transform_3(%arg0: i32) -> (i32, i32) {
    %c0_i32 = arith.constant 0 : i32
    %c0_i32_0 = arith.constant 0 : i32
    %c0_i32_1 = arith.constant 0 : i32
    return %c0_i32, %c0_i32_0 : i32, i32
  }
  func.func @transform_4(%arg0: i32) -> (i32, i32) {
    %c0_i32 = arith.constant 0 : i32
    %c0_i32_0 = arith.constant 0 : i32
    %c0_i32_1 = arith.constant 0 : i32
    return %c0_i32, %c0_i32_0 : i32, i32
  }
  func.func @transform_5(%arg0: i32) -> (i32, i32) {
    %c0_i32 = arith.constant 0 : i32
    %c0_i32_0 = arith.constant 0 : i32
    %c0_i32_1 = arith.constant 0 : i32
    return %c0_i32, %c0_i32_0 : i32, i32
  }
  func.func @transform_6(%arg0: i32) -> (i32, i32) {
    %c0_i32 = arith.constant 0 : i32
    %c0_i32_0 = arith.constant 0 : i32
    %c0_i32_1 = arith.constant 0 : i32
    return %c0_i32, %c0_i32_0 : i32, i32
  }
  func.func @transform_7(%arg0: i32) -> (i32, i32) {
    %c0_i32 = arith.constant 0 : i32
    %c0_i32_0 = arith.constant 0 : i32
    %c0_i32_1 = arith.constant 0 : i32
    return %c0_i32, %c0_i32_0 : i32, i32
  }
  func.func @transform_8(%arg0: i32) -> (i32, i32) {
    %c0_i32 = arith.constant 0 : i32
    %c0_i32_0 = arith.constant 0 : i32
    %c0_i32_1 = arith.constant 0 : i32
    return %c0_i32, %c0_i32_0 : i32, i32
  }
  func.func @transform_9(%arg0: i32) -> (i32, i32) {
    %c0_i32 = arith.constant 0 : i32
    %c0_i32_0 = arith.constant 0 : i32
    %c0_i32_1 = arith.constant 0 : i32
    return %c0_i32, %c0_i32_0 : i32, i32
  }
  func.func @transform_10(%arg0: i32) -> (i32, i32) {
    %c0_i32 = arith.constant 0 : i32
    %c0_i32_0 = arith.constant 0 : i32
    %c0_i32_1 = arith.constant 0 : i32
    return %c0_i32, %c0_i32_0 : i32, i32
  }
  func.func @transform_11(%arg0: i32) -> (i32, i32) {
    %c0_i32 = arith.constant 0 : i32
    %c0_i32_0 = arith.constant 0 : i32
    %c0_i32_1 = arith.constant 0 : i32
    return %c0_i32, %c0_i32_0 : i32, i32
  }
  func.func @transform_12(%arg0: i32) -> (i32, i32) {
    %c0_i32 = arith.constant 0 : i32
    %c0_i32_0 = arith.constant 0 : i32
    %c0_i32_1 = arith.constant 0 : i32
    return %c0_i32, %c0_i32_0 : i32, i32
  }
  func.func @transform_13(%arg0: i32) -> (i32, i32) {
    %c0_i32 = arith.constant 0 : i32
    %c0_i32_0 = arith.constant 0 : i32
    %c0_i32_1 = arith.constant 0 : i32
    return %c0_i32, %c0_i32_0 : i32, i32
  }
}

</mosaic_0001>

<llo_original>
// kernel: decode_layer.1
$region0: #{decode_layer.1}
  #allocation0 [shape = 'u32[]', space=smem, size = 0x4, offset = 0x4, fixed_abs, tag = 'smem constant byte address 0x4 - core index']
  #allocation1 [shape = 'u32[72,128]{1,0:T(1,128)}', space=vmem, size = 0x9000, scoped, tag = 'internal scratch']
  %s0 = inlined_call_operand.vmem [shape: f32[32,128], index: 0, kind: input, shape index: {}]
  %s1 = inlined_call_operand.vmem [shape: f32[2,16,16], index: 1, kind: input, shape index: {}]
  %s2 = inlined_call_operand.vmem [shape: bf16[128,512], index: 2, kind: input, shape index: {}]
  %s3 = inlined_call_operand.vmem [shape: bf16[128,512], index: 3, kind: input, shape index: {}]
  %s4 = inlined_call_operand.vmem [shape: bf16[128,512], index: 4, kind: input, shape index: {}]
  %s5 = inlined_call_operand.vmem [shape: bf16[512,128], index: 5, kind: input, shape index: {}]
  %s6 = inlined_call_operand.vmem [shape: f32[1,128], index: 6, kind: input, shape index: {}]
  %s7 = inlined_call_operand.vmem [shape: f32[1,128], index: 7, kind: input, shape index: {}]
  %s8 = inlined_call_operand.vmem [shape: bf16[128,256], index: 8, kind: input, shape index: {}]
  %s9 = inlined_call_operand.vmem [shape: bf16[256,128], index: 9, kind: input, shape index: {}]
  %s10 = inlined_call_operand.vmem [shape: f32[1,128], index: 10, kind: input, shape index: {}]
  %s11 = inlined_call_operand.vmem [shape: f32[1,128], index: 11, kind: input, shape index: {}]
  %s12 = inlined_call_operand.hbm [shape: f32[32,128], index: 12, kind: output, shape index: {0}]
  %s13 = inlined_call_operand.vmem [shape: f32[16,128], index: 13, kind: output, shape index: {1}]
  %14 = xla_tuple %s12, %s13
  %s15 = sld [smem:[#allocation0]]
  $region66: #{decode_layer.1} parent=0
    _
  %s17 = ssub.s32 1, %s15
  %s18 = scalar_select 0, %s17, %s15
  $region1: #{decode_layer.1} parent=0
    #allocation2 [shape = 'u8[16384]{0}', space=vmem, size = 0x4000, scoped, tag = 'output window, operand 0, single buffered']
    #allocation3 [shape = 's32[1]{0}', space=sflag, size = 0x4, scoped, tag = 'scoped memory for decode_layer.1']
    %19 = vsyncpa [#allocation3], 0
    // Predicated region
    $region2: #{decode_layer.1} parent=1 // pred_check
      _
    $region3: #{decode_layer.1} parent=1 // pred_check_branch
      %21 = sbr.rel (0) target = $region5
    $region4: #{decode_layer.1} parent=1 // pred_region
      _
    $region5: #{decode_layer.1} parent=1 // pred_fallthru
      _
    // Predicated region
    $region6: #{decode_layer.1} parent=1 // pred_check
      _
    $region7: #{decode_layer.1} parent=1 // pred_check_branch
      %23 = sbr.rel (0) target = $region9
    $region8: #{decode_layer.1} parent=1 // pred_region
      _
    $region9: #{decode_layer.1} parent=1 // pred_fallthru
      _
    // Predicated region
    $region10: #{decode_layer.1} parent=1 // pred_check
      _
    $region11: #{decode_layer.1} parent=1 // pred_check_branch
      %25 = sbr.rel (0) target = $region13
    $region12: #{decode_layer.1} parent=1 // pred_region
      _
    $region13: #{decode_layer.1} parent=1 // pred_fallthru
      _
    // Predicated region
    $region14: #{decode_layer.1} parent=1 // pred_check
      _
    $region15: #{decode_layer.1} parent=1 // pred_check_branch
      %27 = sbr.rel (0) target = $region17
    $region16: #{decode_layer.1} parent=1 // pred_region
      _
    $region17: #{decode_layer.1} parent=1 // pred_fallthru
      _
    // Predicated region
    $region18: #{decode_layer.1} parent=1 // pred_check
      _
    $region19: #{decode_layer.1} parent=1 // pred_check_branch
      %29 = sbr.rel (0) target = $region21
    $region20: #{decode_layer.1} parent=1 // pred_region
      _
    $region21: #{decode_layer.1} parent=1 // pred_fallthru
      _
    // Predicated region
    $region22: #{decode_layer.1} parent=1 // pred_check
      _
    $region23: #{decode_layer.1} parent=1 // pred_check_branch
      %31 = sbr.rel (0) target = $region25
    $region24: #{decode_layer.1} parent=1 // pred_region
      _
    $region25: #{decode_layer.1} parent=1 // pred_fallthru
      _
    // Predicated region
    $region26: #{decode_layer.1} parent=1 // pred_check
      _
    $region27: #{decode_layer.1} parent=1 // pred_check_branch
      %33 = sbr.rel (0) target = $region29
    $region28: #{decode_layer.1} parent=1 // pred_region
      _
    $region29: #{decode_layer.1} parent=1 // pred_fallthru
      _
    // Predicated region
    $region30: #{decode_layer.1} parent=1 // pred_check
      _
    $region31: #{decode_layer.1} parent=1 // pred_check_branch
      %35 = sbr.rel (0) target = $region33
    $region32: #{decode_layer.1} parent=1 // pred_region
      _
    $region33: #{decode_layer.1} parent=1 // pred_fallthru
      _
    // Predicated region
    $region34: #{decode_layer.1} parent=1 // pred_check
      _
    $region35: #{decode_layer.1} parent=1 // pred_check_branch
      %37 = sbr.rel (0) target = $region37
    $region36: #{decode_layer.1} parent=1 // pred_region
      _
    $region37: #{decode_layer.1} parent=1 // pred_fallthru
      _
    // Predicated region
    $region38: #{decode_layer.1} parent=1 // pred_check
      _
    $region39: #{decode_layer.1} parent=1 // pred_check_branch
      %39 = sbr.rel (0) target = $region41
    $region40: #{decode_layer.1} parent=1 // pred_region
      _
    $region41: #{decode_layer.1} parent=1 // pred_fallthru
      _
    // Predicated region
    $region42: #{decode_layer.1} parent=1 // pred_check
      _
    $region43: #{decode_layer.1} parent=1 // pred_check_branch
      %41 = sbr.rel (0) target = $region45
    $region44: #{decode_layer.1} parent=1 // pred_region
      _
    $region45: #{decode_layer.1} parent=1 // pred_fallthru
      _
    // Predicated region
    $region46: #{decode_layer.1} parent=1 // pred_check
      _
    $region47: #{decode_layer.1} parent=1 // pred_check_branch
      %43 = sbr.rel (0) target = $region49
    $region48: #{decode_layer.1} parent=1 // pred_region
      _
    $region49: #{decode_layer.1} parent=1 // pred_fallthru
      _
    %v45 = vld [vmem:[%s0] sm:$0xff]
    %v46 = vld [vmem:[%s0 + $0x8] sm:$0xff]
    %v47 = vld [vmem:[%s0 + $0x10] sm:$0xff]
    %v48 = vld [vmem:[%s0 + $0x18] sm:$0xff]
    %v49 = vpack.c.bf16 %v46, %v45
    %v50 = vpack.c.bf16 %v48, %v47
    %v51 = vld [vmem:[%s2] sm:$0xff]
    %v52 = vld [vmem:[%s2 + $0x8] sm:$0xff]
    %v53 = vld [vmem:[%s2 + $0x10] sm:$0xff]
    %v54 = vld [vmem:[%s2 + $0x18] sm:$0xff]
    %v55 = vld [vmem:[%s2 + $0x20] sm:$0xff]
    %v56 = vld [vmem:[%s2 + $0x28] sm:$0xff]
    %v57 = vld [vmem:[%s2 + $0x30] sm:$0xff]
    %v58 = vld [vmem:[%s2 + $0x38] sm:$0xff]
    %v59 = vld [vmem:[%s2 + $0x40] sm:$0xff]
    %v60 = vld [vmem:[%s2 + $0x48] sm:$0xff]
    %v61 = vld [vmem:[%s2 + $0x50] sm:$0xff]
    %v62 = vld [vmem:[%s2 + $0x58] sm:$0xff]
    %v63 = vld [vmem:[%s2 + $0x60] sm:$0xff]
    %v64 = vld [vmem:[%s2 + $0x68] sm:$0xff]
    %v65 = vld [vmem:[%s2 + $0x70] sm:$0xff]
    %v66 = vld [vmem:[%s2 + $0x78] sm:$0xff]
    %v67 = vld [vmem:[%s2 + $0x80] sm:$0xff]
    %v68 = vld [vmem:[%s2 + $0x88] sm:$0xff]
    %v69 = vld [vmem:[%s2 + $0x90] sm:$0xff]
    %v70 = vld [vmem:[%s2 + $0x98] sm:$0xff]
    %v71 = vld [vmem:[%s2 + $0xa0] sm:$0xff]
    %v72 = vld [vmem:[%s2 + $0xa8] sm:$0xff]
    %v73 = vld [vmem:[%s2 + $0xb0] sm:$0xff]
    %v74 = vld [vmem:[%s2 + $0xb8] sm:$0xff]
    %v75 = vld [vmem:[%s2 + $0xc0] sm:$0xff]
    %v76 = vld [vmem:[%s2 + $0xc8] sm:$0xff]
    %v77 = vld [vmem:[%s2 + $0xd0] sm:$0xff]
    %v78 = vld [vmem:[%s2 + $0xd8] sm:$0xff]
    %v79 = vld [vmem:[%s2 + $0xe0] sm:$0xff]
    %v80 = vld [vmem:[%s2 + $0xe8] sm:$0xff]
    %v81 = vld [vmem:[%s2 + $0xf0] sm:$0xff]
    %v82 = vld [vmem:[%s2 + $0xf8] sm:$0xff]
    %v115 = vunpack.c.l.b16 %v51
    %v116 = vunpack.c.h.b16 %v51
    %v117 = vunpack.c.l.b16 %v52
    %v118 = vunpack.c.h.b16 %v52
    %v119 = vunpack.c.l.b16 %v53
    %v120 = vunpack.c.h.b16 %v53
    %v121 = vunpack.c.l.b16 %v54
    %v122 = vunpack.c.h.b16 %v54
    %v123 = vunpack.c.l.b16 %v55
    %v124 = vunpack.c.h.b16 %v55
    %v125 = vunpack.c.l.b16 %v56
    %v126 = vunpack.c.h.b16 %v56
    %v127 = vunpack.c.l.b16 %v57
    %v128 = vunpack.c.h.b16 %v57
    %v129 = vunpack.c.l.b16 %v58
    %v130 = vunpack.c.h.b16 %v58
    %v131 = vunpack.c.l.b16 %v59
    %v132 = vunpack.c.h.b16 %v59
    %v133 = vunpack.c.l.b16 %v60
    %v134 = vunpack.c.h.b16 %v60
    %v135 = vunpack.c.l.b16 %v61
    %v136 = vunpack.c.h.b16 %v61
    %v137 = vunpack.c.l.b16 %v62
    %v138 = vunpack.c.h.b16 %v62
    %v139 = vunpack.c.l.b16 %v63
    %v140 = vunpack.c.h.b16 %v63
    %v141 = vunpack.c.l.b16 %v64
    %v142 = vunpack.c.h.b16 %v64
    %v143 = vunpack.c.l.b16 %v65
    %v144 = vunpack.c.h.b16 %v65
    %v145 = vunpack.c.l.b16 %v66
    %v146 = vunpack.c.h.b16 %v66
    %v147 = vunpack.c.l.b16 %v67
    %v148 = vunpack.c.h.b16 %v67
    %v149 = vunpack.c.l.b16 %v68
    %v150 = vunpack.c.h.b16 %v68
    %v151 = vunpack.c.l.b16 %v69
    %v152 = vunpack.c.h.b16 %v69
    %v153 = vunpack.c.l.b16 %v70
    %v154 = vunpack.c.h.b16 %v70
    %v155 = vunpack.c.l.b16 %v71
    %v156 = vunpack.c.h.b16 %v71
    %v157 = vunpack.c.l.b16 %v72
    %v158 = vunpack.c.h.b16 %v72
    %v159 = vunpack.c.l.b16 %v73
    %v160 = vunpack.c.h.b16 %v73
    %v161 = vunpack.c.l.b16 %v74
    %v162 = vunpack.c.h.b16 %v74
    %v163 = vunpack.c.l.b16 %v75
    %v164 = vunpack.c.h.b16 %v75
    %v165 = vunpack.c.l.b16 %v76
    %v166 = vunpack.c.h.b16 %v76
    %v167 = vunpack.c.l.b16 %v77
    %v168 = vunpack.c.h.b16 %v77
    %v169 = vunpack.c.l.b16 %v78
    %v170 = vunpack.c.h.b16 %v78
    %v171 = vunpack.c.l.b16 %v79
    %v172 = vunpack.c.h.b16 %v79
    %v173 = vunpack.c.l.b16 %v80
    %v174 = vunpack.c.h.b16 %v80
    %v175 = vunpack.c.l.b16 %v81
    %v176 = vunpack.c.h.b16 %v81
    %v177 = vunpack.c.l.b16 %v82
    %v178 = vunpack.c.h.b16 %v82
    %v179 = vpack.c.b16 %v119, %v115
    %v180 = vpack.c.b16 %v120, %v116
    %v181 = vpack.c.b16 %v121, %v117
    %v182 = vpack.c.b16 %v122, %v118
    %v183 = vpack.c.b16 %v127, %v123
    %v184 = vpack.c.b16 %v128, %v124
    %v185 = vpack.c.b16 %v129, %v125
    %v186 = vpack.c.b16 %v130, %v126
    %v187 = vpack.c.b16 %v135, %v131
    %v188 = vpack.c.b16 %v136, %v132
    %v189 = vpack.c.b16 %v137, %v133
    %v190 = vpack.c.b16 %v138, %v134
    %v191 = vpack.c.b16 %v143, %v139
    %v192 = vpack.c.b16 %v144, %v140
    %v193 = vpack.c.b16 %v145, %v141
    %v194 = vpack.c.b16 %v146, %v142
    %v195 = vpack.c.b16 %v151, %v147
    %v196 = vpack.c.b16 %v152, %v148
    %v197 = vpack.c.b16 %v153, %v149
    %v198 = vpack.c.b16 %v154, %v150
    %v199 = vpack.c.b16 %v159, %v155
    %v200 = vpack.c.b16 %v160, %v156
    %v201 = vpack.c.b16 %v161, %v157
    %v202 = vpack.c.b16 %v162, %v158
    %v203 = vpack.c.b16 %v167, %v163
    %v204 = vpack.c.b16 %v168, %v164
    %v205 = vpack.c.b16 %v169, %v165
    %v206 = vpack.c.b16 %v170, %v166
    %v207 = vpack.c.b16 %v175, %v171
    %v208 = vpack.c.b16 %v176, %v172
    %v209 = vpack.c.b16 %v177, %v173
    %v210 = vpack.c.b16 %v178, %v174
    %243 = vmatpush.bf16.msra.mxu0 %v207
    %244 = vmatpush.bf16.msra.mxu0 %v203
    %245 = vmatpush.bf16.msra.mxu0 %v199
    %246 = vmatpush.bf16.msra.mxu0 %v195
    %247 = vmatpush.bf16.msra.mxu0 %v191
    %248 = vmatpush.bf16.msra.mxu0 %v187
    %249 = vmatpush.bf16.msra.mxu0 %v183
    %250 = vmatpush.bf16.msra.mxu0 %v179
    %251 = vmatmul.bf16.gmra.mxu0 %v49
    %v252 = vpop.f32.mrf.mxu0
    %v253 = vadd.f32 0.0, %v252
    %v254 = vpop.f32.mrf.mxu0
    %v255 = vadd.f32 0.0, %v254
    %256 = vmatmul.bf16.gmra.mxu0 %v50
    %v257 = vpop.f32.mrf.mxu0
    %v258 = vadd.f32 0.0, %v257
    %v259 = vpop.f32.mrf.mxu0
    %v260 = vadd.f32 0.0, %v259
    %261 = vdwg.mxu0
    %262 = vmatpush.bf16.msra.mxu0 %v208
    %263 = vmatpush.bf16.msra.mxu0 %v204
    %264 = vmatpush.bf16.msra.mxu0 %v200
    %265 = vmatpush.bf16.msra.mxu0 %v196
    %266 = vmatpush.bf16.msra.mxu0 %v192
    %267 = vmatpush.bf16.msra.mxu0 %v188
    %268 = vmatpush.bf16.msra.mxu0 %v184
    %269 = vmatpush.bf16.msra.mxu0 %v180
    %270 = vmatmul.bf16.gmra.mxu0 %v49
    %v271 = vpop.f32.mrf.mxu0
    %v272 = vadd.f32 0.0, %v271
    %v273 = vpop.f32.mrf.mxu0
    %v274 = vadd.f32 0.0, %v273
    %275 = vmatmul.bf16.gmra.mxu0 %v50
    %v276 = vpop.f32.mrf.mxu0
    %v277 = vadd.f32 0.0, %v276
    %v278 = vpop.f32.mrf.mxu0
    %v279 = vadd.f32 0.0, %v278
    %280 = vdwg.mxu0
    %281 = vmatpush.bf16.msra.mxu0 %v209
    %282 = vmatpush.bf16.msra.mxu0 %v205
    %283 = vmatpush.bf16.msra.mxu0 %v201
    %284 = vmatpush.bf16.msra.mxu0 %v197
    %285 = vmatpush.bf16.msra.mxu0 %v193
    %286 = vmatpush.bf16.msra.mxu0 %v189
    %287 = vmatpush.bf16.msra.mxu0 %v185
    %288 = vmatpush.bf16.msra.mxu0 %v181
    %289 = vmatmul.bf16.gmra.mxu0 %v49
    %v290 = vpop.f32.mrf.mxu0
    %v291 = vadd.f32 0.0, %v290
    %v292 = vpop.f32.mrf.mxu0
    %v293 = vadd.f32 0.0, %v292
    %294 = vmatmul.bf16.gmra.mxu0 %v50
    %v295 = vpop.f32.mrf.mxu0
    %v296 = vadd.f32 0.0, %v295
    %v297 = vpop.f32.mrf.mxu0
    %v298 = vadd.f32 0.0, %v297
    %299 = vdwg.mxu0
    %300 = vmatpush.bf16.msra.mxu0 %v210
    %301 = vmatpush.bf16.msra.mxu0 %v206
    %302 = vmatpush.bf16.msra.mxu0 %v202
    %303 = vmatpush.bf16.msra.mxu0 %v198
    %304 = vmatpush.bf16.msra.mxu0 %v194
    %305 = vmatpush.bf16.msra.mxu0 %v190
    %306 = vmatpush.bf16.msra.mxu0 %v186
    %307 = vmatpush.bf16.msra.mxu0 %v182
    %308 = vmatmul.bf16.gmra.mxu0 %v49
    %v309 = vpop.f32.mrf.mxu0
    %v310 = vadd.f32 0.0, %v309
    %v311 = vpop.f32.mrf.mxu0
    %v312 = vadd.f32 0.0, %v311
    %313 = vmatmul.bf16.gmra.mxu0 %v50
    %v314 = vpop.f32.mrf.mxu0
    %v315 = vadd.f32 0.0, %v314
    %v316 = vpop.f32.mrf.mxu0
    %v317 = vadd.f32 0.0, %v316
    %318 = vdwg.mxu0
    %v319 = vld [vmem:[%s3] sm:$0xff]
    %v320 = vld [vmem:[%s3 + $0x8] sm:$0xff]
    %v321 = vld [vmem:[%s3 + $0x10] sm:$0xff]
    %v322 = vld [vmem:[%s3 + $0x18] sm:$0xff]
    %v323 = vld [vmem:[%s3 + $0x20] sm:$0xff]
    %v324 = vld [vmem:[%s3 + $0x28] sm:$0xff]
    %v325 = vld [vmem:[%s3 + $0x30] sm:$0xff]
    %v326 = vld [vmem:[%s3 + $0x38] sm:$0xff]
    %v327 = vld [vmem:[%s3 + $0x40] sm:$0xff]
    %v328 = vld [vmem:[%s3 + $0x48] sm:$0xff]
    %v329 = vld [vmem:[%s3 + $0x50] sm:$0xff]
    %v330 = vld [vmem:[%s3 + $0x58] sm:$0xff]
    %v331 = vld [vmem:[%s3 + $0x60] sm:$0xff]
    %v332 = vld [vmem:[%s3 + $0x68] sm:$0xff]
    %v333 = vld [vmem:[%s3 + $0x70] sm:$0xff]
    %v334 = vld [vmem:[%s3 + $0x78] sm:$0xff]
    %v335 = vld [vmem:[%s3 + $0x80] sm:$0xff]
    %v336 = vld [vmem:[%s3 + $0x88] sm:$0xff]
    %v337 = vld [vmem:[%s3 + $0x90] sm:$0xff]
    %v338 = vld [vmem:[%s3 + $0x98] sm:$0xff]
    %v339 = vld [vmem:[%s3 + $0xa0] sm:$0xff]
    %v340 = vld [vmem:[%s3 + $0xa8] sm:$0xff]
    %v341 = vld [vmem:[%s3 + $0xb0] sm:$0xff]
    %v342 = vld [vmem:[%s3 + $0xb8] sm:$0xff]
    %v343 = vld [vmem:[%s3 + $0xc0] sm:$0xff]
    %v344 = vld [vmem:[%s3 + $0xc8] sm:$0xff]
    %v345 = vld [vmem:[%s3 + $0xd0] sm:$0xff]
    %v346 = vld [vmem:[%s3 + $0xd8] sm:$0xff]
    %v347 = vld [vmem:[%s3 + $0xe0] sm:$0xff]
    %v348 = vld [vmem:[%s3 + $0xe8] sm:$0xff]
    %v349 = vld [vmem:[%s3 + $0xf0] sm:$0xff]
    %v350 = vld [vmem:[%s3 + $0xf8] sm:$0xff]
    %v383 = vunpack.c.l.b16 %v319
    %v384 = vunpack.c.h.b16 %v319
    %v385 = vunpack.c.l.b16 %v320
    %v386 = vunpack.c.h.b16 %v320
    %v387 = vunpack.c.l.b16 %v321
    %v388 = vunpack.c.h.b16 %v321
    %v389 = vunpack.c.l.b16 %v322
    %v390 = vunpack.c.h.b16 %v322
    %v391 = vunpack.c.l.b16 %v323
    %v392 = vunpack.c.h.b16 %v323
    %v393 = vunpack.c.l.b16 %v324
    %v394 = vunpack.c.h.b16 %v324
    %v395 = vunpack.c.l.b16 %v325
    %v396 = vunpack.c.h.b16 %v325
    %v397 = vunpack.c.l.b16 %v326
    %v398 = vunpack.c.h.b16 %v326
    %v399 = vunpack.c.l.b16 %v327
    %v400 = vunpack.c.h.b16 %v327
    %v401 = vunpack.c.l.b16 %v328
    %v402 = vunpack.c.h.b16 %v328
    %v403 = vunpack.c.l.b16 %v329
    %v404 = vunpack.c.h.b16 %v329
    %v405 = vunpack.c.l.b16 %v330
    %v406 = vunpack.c.h.b16 %v330
    %v407 = vunpack.c.l.b16 %v331
    %v408 = vunpack.c.h.b16 %v331
    %v409 = vunpack.c.l.b16 %v332
    %v410 = vunpack.c.h.b16 %v332
    %v411 = vunpack.c.l.b16 %v333
    %v412 = vunpack.c.h.b16 %v333
    %v413 = vunpack.c.l.b16 %v334
    %v414 = vunpack.c.h.b16 %v334
    %v415 = vunpack.c.l.b16 %v335
    %v416 = vunpack.c.h.b16 %v335
    %v417 = vunpack.c.l.b16 %v336
    %v418 = vunpack.c.h.b16 %v336
    %v419 = vunpack.c.l.b16 %v337
    %v420 = vunpack.c.h.b16 %v337
    %v421 = vunpack.c.l.b16 %v338
    %v422 = vunpack.c.h.b16 %v338
    %v423 = vunpack.c.l.b16 %v339
    %v424 = vunpack.c.h.b16 %v339
    %v425 = vunpack.c.l.b16 %v340
    %v426 = vunpack.c.h.b16 %v340
    %v427 = vunpack.c.l.b16 %v341
    %v428 = vunpack.c.h.b16 %v341
    %v429 = vunpack.c.l.b16 %v342
    %v430 = vunpack.c.h.b16 %v342
    %v431 = vunpack.c.l.b16 %v343
    %v432 = vunpack.c.h.b16 %v343
    %v433 = vunpack.c.l.b16 %v344
    %v434 = vunpack.c.h.b16 %v344
    %v435 = vunpack.c.l.b16 %v345
    %v436 = vunpack.c.h.b16 %v345
    %v437 = vunpack.c.l.b16 %v346
    %v438 = vunpack.c.h.b16 %v346
    %v439 = vunpack.c.l.b16 %v347
    %v440 = vunpack.c.h.b16 %v347
    %v441 = vunpack.c.l.b16 %v348
    %v442 = vunpack.c.h.b16 %v348
    %v443 = vunpack.c.l.b16 %v349
    %v444 = vunpack.c.h.b16 %v349
    %v445 = vunpack.c.l.b16 %v350
    %v446 = vunpack.c.h.b16 %v350
    %v447 = vpack.c.b16 %v387, %v383
    %v448 = vpack.c.b16 %v388, %v384
    %v449 = vpack.c.b16 %v389, %v385
    %v450 = vpack.c.b16 %v390, %v386
    %v451 = vpack.c.b16 %v395, %v391
    %v452 = vpack.c.b16 %v396, %v392
    %v453 = vpack.c.b16 %v397, %v393
    %v454 = vpack.c.b16 %v398, %v394
    %v455 = vpack.c.b16 %v403, %v399
    %v456 = vpack.c.b16 %v404, %v400
    %v457 = vpack.c.b16 %v405, %v401
    %v458 = vpack.c.b16 %v406, %v402
    %v459 = vpack.c.b16 %v411, %v407
    %v460 = vpack.c.b16 %v412, %v408
    %v461 = vpack.c.b16 %v413, %v409
    %v462 = vpack.c.b16 %v414, %v410
    %v463 = vpack.c.b16 %v419, %v415
    %v464 = vpack.c.b16 %v420, %v416
    %v465 = vpack.c.b16 %v421, %v417
    %v466 = vpack.c.b16 %v422, %v418
    %v467 = vpack.c.b16 %v427, %v423
    %v468 = vpack.c.b16 %v428, %v424
    %v469 = vpack.c.b16 %v429, %v425
    %v470 = vpack.c.b16 %v430, %v426
    %v471 = vpack.c.b16 %v435, %v431
    %v472 = vpack.c.b16 %v436, %v432
    %v473 = vpack.c.b16 %v437, %v433
    %v474 = vpack.c.b16 %v438, %v434
    %v475 = vpack.c.b16 %v443, %v439
    %v476 = vpack.c.b16 %v444, %v440
    %v477 = vpack.c.b16 %v445, %v441
    %v478 = vpack.c.b16 %v446, %v442
    %511 = vmatpush.bf16.msra.mxu0 %v475
    %512 = vmatpush.bf16.msra.mxu0 %v471
    %513 = vmatpush.bf16.msra.mxu0 %v467
    %514 = vmatpush.bf16.msra.mxu0 %v463
    %515 = vmatpush.bf16.msra.mxu0 %v459
    %516 = vmatpush.bf16.msra.mxu0 %v455
    %517 = vmatpush.bf16.msra.mxu0 %v451
    %518 = vmatpush.bf16.msra.mxu0 %v447
    %519 = vmatmul.bf16.gmra.mxu0 %v49
    %v520 = vpop.f32.mrf.mxu0
    %v521 = vadd.f32 0.0, %v520
    %v522 = vpop.f32.mrf.mxu0
    %v523 = vadd.f32 0.0, %v522
    %524 = vmatmul.bf16.gmra.mxu0 %v50
    %v525 = vpop.f32.mrf.mxu0
    %v526 = vadd.f32 0.0, %v525
    %v527 = vpop.f32.mrf.mxu0
    %v528 = vadd.f32 0.0, %v527
    %529 = vdwg.mxu0
    %530 = vmatpush.bf16.msra.mxu0 %v476
    %531 = vmatpush.bf16.msra.mxu0 %v472
    %532 = vmatpush.bf16.msra.mxu0 %v468
    %533 = vmatpush.bf16.msra.mxu0 %v464
    %534 = vmatpush.bf16.msra.mxu0 %v460
    %535 = vmatpush.bf16.msra.mxu0 %v456
    %536 = vmatpush.bf16.msra.mxu0 %v452
    %537 = vmatpush.bf16.msra.mxu0 %v448
    %538 = vmatmul.bf16.gmra.mxu0 %v49
    %v539 = vpop.f32.mrf.mxu0
    %v540 = vadd.f32 0.0, %v539
    %v541 = vpop.f32.mrf.mxu0
    %v542 = vadd.f32 0.0, %v541
    %543 = vmatmul.bf16.gmra.mxu0 %v50
    %v544 = vpop.f32.mrf.mxu0
    %v545 = vadd.f32 0.0, %v544
    %v546 = vpop.f32.mrf.mxu0
    %v547 = vadd.f32 0.0, %v546
    %548 = vdwg.mxu0
    %549 = vmatpush.bf16.msra.mxu0 %v477
    %550 = vmatpush.bf16.msra.mxu0 %v473
    %551 = vmatpush.bf16.msra.mxu0 %v469
    %552 = vmatpush.bf16.msra.mxu0 %v465
    %553 = vmatpush.bf16.msra.mxu0 %v461
    %554 = vmatpush.bf16.msra.mxu0 %v457
    %555 = vmatpush.bf16.msra.mxu0 %v453
    %556 = vmatpush.bf16.msra.mxu0 %v449
    %557 = vmatmul.bf16.gmra.mxu0 %v49
    %v558 = vpop.f32.mrf.mxu0
    %v559 = vadd.f32 0.0, %v558
    %v560 = vpop.f32.mrf.mxu0
    %v561 = vadd.f32 0.0, %v560
    %562 = vmatmul.bf16.gmra.mxu0 %v50
    %v563 = vpop.f32.mrf.mxu0
    %v564 = vadd.f32 0.0, %v563
    %v565 = vpop.f32.mrf.mxu0
    %v566 = vadd.f32 0.0, %v565
    %567 = vdwg.mxu0
    %568 = vmatpush.bf16.msra.mxu0 %v478
    %569 = vmatpush.bf16.msra.mxu0 %v474
    %570 = vmatpush.bf16.msra.mxu0 %v470
    %571 = vmatpush.bf16.msra.mxu0 %v466
    %572 = vmatpush.bf16.msra.mxu0 %v462
    %573 = vmatpush.bf16.msra.mxu0 %v458
    %574 = vmatpush.bf16.msra.mxu0 %v454
    %575 = vmatpush.bf16.msra.mxu0 %v450
    %576 = vmatmul.bf16.gmra.mxu0 %v49
    %v577 = vpop.f32.mrf.mxu0
    %v578 = vadd.f32 0.0, %v577
    %v579 = vpop.f32.mrf.mxu0
    %v580 = vadd.f32 0.0, %v579
    %581 = vmatmul.bf16.gmra.mxu0 %v50
    %v582 = vpop.f32.mrf.mxu0
    %v583 = vadd.f32 0.0, %v582
    %v584 = vpop.f32.mrf.mxu0
    %v585 = vadd.f32 0.0, %v584
    %586 = vdwg.mxu0
    %v587 = vld [vmem:[%s4] sm:$0xff]
    %v588 = vld [vmem:[%s4 + $0x8] sm:$0xff]
    %v589 = vld [vmem:[%s4 + $0x10] sm:$0xff]
    %v590 = vld [vmem:[%s4 + $0x18] sm:$0xff]
    %v591 = vld [vmem:[%s4 + $0x20] sm:$0xff]
    %v592 = vld [vmem:[%s4 + $0x28] sm:$0xff]
    %v593 = vld [vmem:[%s4 + $0x30] sm:$0xff]
    %v594 = vld [vmem:[%s4 + $0x38] sm:$0xff]
    %v595 = vld [vmem:[%s4 + $0x40] sm:$0xff]
    %v596 = vld [vmem:[%s4 + $0x48] sm:$0xff]
    %v597 = vld [vmem:[%s4 + $0x50] sm:$0xff]
    %v598 = vld [vmem:[%s4 + $0x58] sm:$0xff]
    %v599 = vld [vmem:[%s4 + $0x60] sm:$0xff]
    %v600 = vld [vmem:[%s4 + $0x68] sm:$0xff]
    %v601 = vld [vmem:[%s4 + $0x70] sm:$0xff]
    %v602 = vld [vmem:[%s4 + $0x78] sm:$0xff]
    %v603 = vld [vmem:[%s4 + $0x80] sm:$0xff]
    %v604 = vld [vmem:[%s4 + $0x88] sm:$0xff]
    %v605 = vld [vmem:[%s4 + $0x90] sm:$0xff]
    %v606 = vld [vmem:[%s4 + $0x98] sm:$0xff]
    %v607 = vld [vmem:[%s4 + $0xa0] sm:$0xff]
    %v608 = vld [vmem:[%s4 + $0xa8] sm:$0xff]
    %v609 = vld [vmem:[%s4 + $0xb0] sm:$0xff]
    %v610 = vld [vmem:[%s4 + $0xb8] sm:$0xff]
    %v611 = vld [vmem:[%s4 + $0xc0] sm:$0xff]
    %v612 = vld [vmem:[%s4 + $0xc8] sm:$0xff]
    %v613 = vld [vmem:[%s4 + $0xd0] sm:$0xff]
    %v614 = vld [vmem:[%s4 + $0xd8] sm:$0xff]
    %v615 = vld [vmem:[%s4 + $0xe0] sm:$0xff]
    %v616 = vld [vmem:[%s4 + $0xe8] sm:$0xff]
    %v617 = vld [vmem:[%s4 + $0xf0] sm:$0xff]
    %v618 = vld [vmem:[%s4 + $0xf8] sm:$0xff]
    %v651 = vunpack.c.l.b16 %v587
    %v652 = vunpack.c.h.b16 %v587
    %v653 = vunpack.c.l.b16 %v588
    %v654 = vunpack.c.h.b16 %v588
    %v655 = vunpack.c.l.b16 %v589
    %v656 = vunpack.c.h.b16 %v589
    %v657 = vunpack.c.l.b16 %v590
    %v658 = vunpack.c.h.b16 %v590
    %v659 = vunpack.c.l.b16 %v591
    %v660 = vunpack.c.h.b16 %v591
    %v661 = vunpack.c.l.b16 %v592
    %v662 = vunpack.c.h.b16 %v592
    %v663 = vunpack.c.l.b16 %v593
    %v664 = vunpack.c.h.b16 %v593
    %v665 = vunpack.c.l.b16 %v594
    %v666 = vunpack.c.h.b16 %v594
    %v667 = vunpack.c.l.b16 %v595
    %v668 = vunpack.c.h.b16 %v595
    %v669 = vunpack.c.l.b16 %v596
    %v670 = vunpack.c.h.b16 %v596
    %v671 = vunpack.c.l.b16 %v597
    %v672 = vunpack.c.h.b16 %v597
    %v673 = vunpack.c.l.b16 %v598
    %v674 = vunpack.c.h.b16 %v598
    %v675 = vunpack.c.l.b16 %v599
    %v676 = vunpack.c.h.b16 %v599
    %v677 = vunpack.c.l.b16 %v600
    %v678 = vunpack.c.h.b16 %v600
    %v679 = vunpack.c.l.b16 %v601
    %v680 = vunpack.c.h.b16 %v601
    %v681 = vunpack.c.l.b16 %v602
    %v682 = vunpack.c.h.b16 %v602
    %v683 = vunpack.c.l.b16 %v603
    %v684 = vunpack.c.h.b16 %v603
    %v685 = vunpack.c.l.b16 %v604
    %v686 = vunpack.c.h.b16 %v604
    %v687 = vunpack.c.l.b16 %v605
    %v688 = vunpack.c.h.b16 %v605
    %v689 = vunpack.c.l.b16 %v606
    %v690 = vunpack.c.h.b16 %v606
    %v691 = vunpack.c.l.b16 %v607
    %v692 = vunpack.c.h.b16 %v607
    %v693 = vunpack.c.l.b16 %v608
    %v694 = vunpack.c.h.b16 %v608
    %v695 = vunpack.c.l.b16 %v609
    %v696 = vunpack.c.h.b16 %v609
    %v697 = vunpack.c.l.b16 %v610
    %v698 = vunpack.c.h.b16 %v610
    %v699 = vunpack.c.l.b16 %v611
    %v700 = vunpack.c.h.b16 %v611
    %v701 = vunpack.c.l.b16 %v612
    %v702 = vunpack.c.h.b16 %v612
    %v703 = vunpack.c.l.b16 %v613
    %v704 = vunpack.c.h.b16 %v613
    %v705 = vunpack.c.l.b16 %v614
    %v706 = vunpack.c.h.b16 %v614
    %v707 = vunpack.c.l.b16 %v615
    %v708 = vunpack.c.h.b16 %v615
    %v709 = vunpack.c.l.b16 %v616
    %v710 = vunpack.c.h.b16 %v616
    %v711 = vunpack.c.l.b16 %v617
    %v712 = vunpack.c.h.b16 %v617
    %v713 = vunpack.c.l.b16 %v618
    %v714 = vunpack.c.h.b16 %v618
    %v715 = vpack.c.b16 %v655, %v651
    %v716 = vpack.c.b16 %v656, %v652
    %v717 = vpack.c.b16 %v657, %v653
    %v718 = vpack.c.b16 %v658, %v654
    %v719 = vpack.c.b16 %v663, %v659
    %v720 = vpack.c.b16 %v664, %v660
    %v721 = vpack.c.b16 %v665, %v661
    %v722 = vpack.c.b16 %v666, %v662
    %v723 = vpack.c.b16 %v671, %v667
    %v724 = vpack.c.b16 %v672, %v668
    %v725 = vpack.c.b16 %v673, %v669
    %v726 = vpack.c.b16 %v674, %v670
    %v727 = vpack.c.b16 %v679, %v675
    %v728 = vpack.c.b16 %v680, %v676
    %v729 = vpack.c.b16 %v681, %v677
    %v730 = vpack.c.b16 %v682, %v678
    %v731 = vpack.c.b16 %v687, %v683
    %v732 = vpack.c.b16 %v688, %v684
    %v733 = vpack.c.b16 %v689, %v685
    %v734 = vpack.c.b16 %v690, %v686
    %v735 = vpack.c.b16 %v695, %v691
    %v736 = vpack.c.b16 %v696, %v692
    %v737 = vpack.c.b16 %v697, %v693
    %v738 = vpack.c.b16 %v698, %v694
    %v739 = vpack.c.b16 %v703, %v699
    %v740 = vpack.c.b16 %v704, %v700
    %v741 = vpack.c.b16 %v705, %v701
    %v742 = vpack.c.b16 %v706, %v702
    %v743 = vpack.c.b16 %v711, %v707
    %v744 = vpack.c.b16 %v712, %v708
    %v745 = vpack.c.b16 %v713, %v709
    %v746 = vpack.c.b16 %v714, %v710
    %779 = vmatpush.bf16.msra.mxu0 %v743
    %780 = vmatpush.bf16.msra.mxu0 %v739
    %781 = vmatpush.bf16.msra.mxu0 %v735
    %782 = vmatpush.bf16.msra.mxu0 %v731
    %783 = vmatpush.bf16.msra.mxu0 %v727
    %784 = vmatpush.bf16.msra.mxu0 %v723
    %785 = vmatpush.bf16.msra.mxu0 %v719
    %786 = vmatpush.bf16.msra.mxu0 %v715
    %787 = vmatmul.bf16.gmra.mxu0 %v49
    %v788 = vpop.f32.mrf.mxu0
    %v789 = vadd.f32 0.0, %v788
    %v790 = vpop.f32.mrf.mxu0
    %v791 = vadd.f32 0.0, %v790
    %792 = vmatmul.bf16.gmra.mxu0 %v50
    %v793 = vpop.f32.mrf.mxu0
    %v794 = vadd.f32 0.0, %v793
    %v795 = vpop.f32.mrf.mxu0
    %v796 = vadd.f32 0.0, %v795
    %797 = vdwg.mxu0
    %798 = vmatpush.bf16.msra.mxu0 %v744
    %799 = vmatpush.bf16.msra.mxu0 %v740
    %800 = vmatpush.bf16.msra.mxu0 %v736
    %801 = vmatpush.bf16.msra.mxu0 %v732
    %802 = vmatpush.bf16.msra.mxu0 %v728
    %803 = vmatpush.bf16.msra.mxu0 %v724
    %804 = vmatpush.bf16.msra.mxu0 %v720
    %805 = vmatpush.bf16.msra.mxu0 %v716
    %806 = vmatmul.bf16.gmra.mxu0 %v49
    %v807 = vpop.f32.mrf.mxu0
    %v808 = vadd.f32 0.0, %v807
    %v809 = vpop.f32.mrf.mxu0
    %v810 = vadd.f32 0.0, %v809
    %811 = vmatmul.bf16.gmra.mxu0 %v50
    %v812 = vpop.f32.mrf.mxu0
    %v813 = vadd.f32 0.0, %v812
    %v814 = vpop.f32.mrf.mxu0
    %v815 = vadd.f32 0.0, %v814
    %816 = vdwg.mxu0
    %817 = vmatpush.bf16.msra.mxu0 %v745
    %818 = vmatpush.bf16.msra.mxu0 %v741
    %819 = vmatpush.bf16.msra.mxu0 %v737
    %820 = vmatpush.bf16.msra.mxu0 %v733
    %821 = vmatpush.bf16.msra.mxu0 %v729
    %822 = vmatpush.bf16.msra.mxu0 %v725
    %823 = vmatpush.bf16.msra.mxu0 %v721
    %824 = vmatpush.bf16.msra.mxu0 %v717
    %825 = vmatmul.bf16.gmra.mxu0 %v49
    %v826 = vpop.f32.mrf.mxu0
    %v827 = vadd.f32 0.0, %v826
    %v828 = vpop.f32.mrf.mxu0
    %v829 = vadd.f32 0.0, %v828
    %830 = vmatmul.bf16.gmra.mxu0 %v50
    %v831 = vpop.f32.mrf.mxu0
    %v832 = vadd.f32 0.0, %v831
    %v833 = vpop.f32.mrf.mxu0
    %v834 = vadd.f32 0.0, %v833
    %835 = vdwg.mxu0
    %836 = vmatpush.bf16.msra.mxu0 %v746
    %837 = vmatpush.bf16.msra.mxu0 %v742
    %838 = vmatpush.bf16.msra.mxu0 %v738
    %839 = vmatpush.bf16.msra.mxu0 %v734
    %840 = vmatpush.bf16.msra.mxu0 %v730
    %841 = vmatpush.bf16.msra.mxu0 %v726
    %842 = vmatpush.bf16.msra.mxu0 %v722
    %843 = vmatpush.bf16.msra.mxu0 %v718
    %844 = vmatmul.bf16.gmra.mxu0 %v49
    %v845 = vpop.f32.mrf.mxu0
    %v846 = vadd.f32 0.0, %v845
    %v847 = vpop.f32.mrf.mxu0
    %v848 = vadd.f32 0.0, %v847
    %849 = vmatmul.bf16.gmra.mxu0 %v50
    %v850 = vpop.f32.mrf.mxu0
    %v851 = vadd.f32 0.0, %v850
    %v852 = vpop.f32.mrf.mxu0
    %v853 = vadd.f32 0.0, %v852
    %854 = vdwg.mxu0
    %v855 = vpack.c.bf16 %v272, %v253
    %v856 = vpack.c.bf16 %v310, %v291
    %v857 = vpack.c.bf16 %v274, %v255
    %v858 = vpack.c.bf16 %v312, %v293
    %v859 = vpack.c.bf16 %v277, %v258
    %v860 = vpack.c.bf16 %v315, %v296
    %v861 = vpack.c.bf16 %v279, %v260
    %v862 = vpack.c.bf16 %v317, %v298
    %v863 = vpack.c.bf16 %v540, %v521
    %v864 = vpack.c.bf16 %v578, %v559
    %v865 = vpack.c.bf16 %v542, %v523
    %v866 = vpack.c.bf16 %v580, %v561
    %v867 = vpack.c.bf16 %v545, %v526
    %v868 = vpack.c.bf16 %v583, %v564
    %v869 = vpack.c.bf16 %v547, %v528
    %v870 = vpack.c.bf16 %v585, %v566
    %v871 = vpack.c.bf16 %v808, %v789
    %v872 = vpack.c.bf16 %v846, %v827
    %v873 = vpack.c.bf16 %v810, %v791
    %v874 = vpack.c.bf16 %v848, %v829
    %v875 = vpack.c.bf16 %v813, %v794
    %v876 = vpack.c.bf16 %v851, %v832
    %v877 = vpack.c.bf16 %v815, %v796
    %v878 = vpack.c.bf16 %v853, %v834
    %v879 = vld [vmem:[%s1] sm:$0xff]
    %v880 = vld [vmem:[%s1 + $0x8] sm:$0xff]
    %v883 = vunpack.c.l.b16 %v855
    %v884 = vunpack.c.l.b16 %v857
    %v885 = vpack.c.b16 %v884, %v883
    %v889 = vunpack.c.l.b16 %v863
    %v890 = vunpack.c.l.b16 %v865
    %v891 = vpack.c.b16 %v890, %v889
    %893 = vmatpush.bf16.xpose.msra.mxu0 0
    %894 = vmatpush.bf16.xpose.msra.mxu0 0
    %895 = vmatpush.bf16.xpose.msra.mxu0 0
    %896 = vmatpush.bf16.xpose.msra.mxu0 0
    %897 = vmatpush.bf16.xpose.msra.mxu0 0
    %898 = vmatpush.bf16.xpose.msra.mxu0 0
    %899 = vmatpush.bf16.xpose.msra.mxu0 0
    %900 = vmatpush.bf16.xpose.msra.mxu0 %v891
    %901 = vmatmul.bf16.gmra.mxu0 %v885
    %v902 = vpop.f32.mrf.mxu0
    %v903 = vadd.f32 %v879, %v902
    %v904 = vpop.f32.mrf.mxu0
    %v905 = vadd.f32 %v880, %v904
    %906 = vdwg.mxu0
    %vm907 = vcmask 130048
    %v908 = vsel %vm907, %v903, -inf
    %909 = vmax.xlane.f32.xlu0 %v908
    %v910 = vpop.xlane.xlu0 %909
    %v911 = vsel %vm907, %v905, -inf
    %912 = vmax.xlane.f32.xlu0 %v911
    %v913 = vpop.xlane.xlu0 %912
    %v914 = vsub.f32 %v903, %v910
    %v915 = vsub.f32 %v905, %v913
    %v916 = vmul.f32 %v914, 1.442695
    %v917 = vpow.pop %v916
    %v918 = vmul.f32 %v915, 1.442695
    %v919 = vpow.pop %v918
    %v920 = vsel %vm907, %v917, 0.0
    %921 = vadd.xlane.f32.xlu0 %v920
    %v922 = vpop.xlane.xlu0 %921
    %v923 = vsel %vm907, %v919, 0.0
    %924 = vadd.xlane.f32.xlu0 %v923
    %v925 = vpop.xlane.xlu0 %924
    %v926 = vrcp.pop %v922
    %v927 = vrcp.pop %v925
    %v928 = vmul.f32 %v917, %v926
    %v929 = vmul.f32 %v919, %v927
    %930 = vst.msk [vmem:[%s13] sm:$0xff] %vm907, %v928
    %931 = vst.msk [vmem:[%s13 + $0x8] sm:$0xff] %vm907, %v929
    %v932 = vpack.c.bf16 %v929, %v928
    %v935 = vunpack.c.l.b16 %v871
    %v936 = vunpack.c.l.b16 %v873
    %v937 = vpack.c.b16 %v936, %v935
    %v940 = vsel %vm907, %v932, 0
    %942 = vmatpush.bf16.msra.mxu0 0
    %943 = vmatpush.bf16.msra.mxu0 0
    %944 = vmatpush.bf16.msra.mxu0 0
    %945 = vmatpush.bf16.msra.mxu0 0
    %946 = vmatpush.bf16.msra.mxu0 0
    %947 = vmatpush.bf16.msra.mxu0 0
    %948 = vmatpush.bf16.msra.mxu0 0
    %949 = vmatpush.bf16.msra.mxu0 %v937
    %950 = vmatmul.bf16.gmra.mxu0 %v940
    %v951 = vpop.f32.mrf.mxu0
    %v952 = vadd.f32 0.0, %v951
    %v953 = vpop.f32.mrf.mxu0
    %v954 = vadd.f32 0.0, %v953
    %955 = vdwg.mxu0
    %v956 = vunpack.c.h.b16 %v855
    %v957 = vunpack.c.h.b16 %v857
    %v958 = vpack.c.b16 %v957, %v956
    %v960 = vunpack.c.h.b16 %v863
    %v961 = vunpack.c.h.b16 %v865
    %v962 = vpack.c.b16 %v961, %v960
    %964 = vmatpush.bf16.xpose.msra.mxu0 0
    %965 = vmatpush.bf16.xpose.msra.mxu0 0
    %966 = vmatpush.bf16.xpose.msra.mxu0 0
    %967 = vmatpush.bf16.xpose.msra.mxu0 0
    %968 = vmatpush.bf16.xpose.msra.mxu0 0
    %969 = vmatpush.bf16.xpose.msra.mxu0 0
    %970 = vmatpush.bf16.xpose.msra.mxu0 0
    %971 = vmatpush.bf16.xpose.msra.mxu0 %v962
    %972 = vmatmul.bf16.gmra.mxu0 %v958
    %v973 = vpop.f32.mrf.mxu0
    %v974 = vadd.f32 %v879, %v973
    %v975 = vpop.f32.mrf.mxu0
    %v976 = vadd.f32 %v880, %v975
    %977 = vdwg.mxu0
    %v978 = vsel %vm907, %v974, -inf
    %979 = vmax.xlane.f32.xlu0 %v978
    %v980 = vpop.xlane.xlu0 %979
    %v981 = vsel %vm907, %v976, -inf
    %982 = vmax.xlane.f32.xlu0 %v981
    %v983 = vpop.xlane.xlu0 %982
    %v984 = vsub.f32 %v974, %v980
    %v985 = vsub.f32 %v976, %v983
    %v986 = vmul.f32 %v984, 1.442695
    %v987 = vpow.pop %v986
    %v988 = vmul.f32 %v985, 1.442695
    %v989 = vpow.pop %v988
    %v990 = vsel %vm907, %v987, 0.0
    %991 = vadd.xlane.f32.xlu0 %v990
    %v992 = vpop.xlane.xlu0 %991
    %v993 = vsel %vm907, %v989, 0.0
    %994 = vadd.xlane.f32.xlu0 %v993
    %v995 = vpop.xlane.xlu0 %994
    %v996 = vrcp.pop %v992
    %v997 = vrcp.pop %v995
    %v998 = vmul.f32 %v987, %v996
    %v999 = vmul.f32 %v989, %v997
    %1002 = vrot.lane.b32.xlu0 %v998, 16
    %v1003 = vpop.permute.xlu0 %1002
    %1004 = vrot.lane.b32.xlu0 %v999, 16
    %v1005 = vpop.permute.xlu0 %1004
    %vm1008 = vcmask 261248
    %1009 = vst.msk [vmem:[%s13] sm:$0xff] %vm1008, %v1003
    %1010 = vst.msk [vmem:[%s13 + $0x8] sm:$0xff] %vm1008, %v1005
    %v1011 = vpack.c.bf16 %v999, %v998
    %v1012 = vunpack.c.h.b16 %v871
    %v1013 = vunpack.c.h.b16 %v873
    %v1014 = vpack.c.b16 %v1013, %v1012
    %v1017 = vsel %vm907, %v1011, 0
    %1019 = vmatpush.bf16.msra.mxu0 0
    %1020 = vmatpush.bf16.msra.mxu0 0
    %1021 = vmatpush.bf16.msra.mxu0 0
    %1022 = vmatpush.bf16.msra.mxu0 0
    %1023 = vmatpush.bf16.msra.mxu0 0
    %1024 = vmatpush.bf16.msra.mxu0 0
    %1025 = vmatpush.bf16.msra.mxu0 0
    %1026 = vmatpush.bf16.msra.mxu0 %v1014
    %1027 = vmatmul.bf16.gmra.mxu0 %v1017
    %v1028 = vpop.f32.mrf.mxu0
    %v1029 = vadd.f32 0.0, %v1028
    %v1030 = vpop.f32.mrf.mxu0
    %v1031 = vadd.f32 0.0, %v1030
    %1032 = vdwg.mxu0
    %v1035 = vunpack.c.l.b16 %v856
    %v1036 = vunpack.c.l.b16 %v858
    %v1037 = vpack.c.b16 %v1036, %v1035
    %v1041 = vunpack.c.l.b16 %v864
    %v1042 = vunpack.c.l.b16 %v866
    %v1043 = vpack.c.b16 %v1042, %v1041
    %1045 = vmatpush.bf16.xpose.msra.mxu0 0
    %1046 = vmatpush.bf16.xpose.msra.mxu0 0
    %1047 = vmatpush.bf16.xpose.msra.mxu0 0
    %1048 = vmatpush.bf16.xpose.msra.mxu0 0
    %1049 = vmatpush.bf16.xpose.msra.mxu0 0
    %1050 = vmatpush.bf16.xpose.msra.mxu0 0
    %1051 = vmatpush.bf16.xpose.msra.mxu0 0
    %1052 = vmatpush.bf16.xpose.msra.mxu0 %v1043
    %1053 = vmatmul.bf16.gmra.mxu0 %v1037
    %v1054 = vpop.f32.mrf.mxu0
    %v1055 = vadd.f32 %v879, %v1054
    %v1056 = vpop.f32.mrf.mxu0
    %v1057 = vadd.f32 %v880, %v1056
    %1058 = vdwg.mxu0
    %v1059 = vsel %vm907, %v1055, -inf
    %1060 = vmax.xlane.f32.xlu0 %v1059
    %v1061 = vpop.xlane.xlu0 %1060
    %v1062 = vsel %vm907, %v1057, -inf
    %1063 = vmax.xlane.f32.xlu0 %v1062
    %v1064 = vpop.xlane.xlu0 %1063
    %v1065 = vsub.f32 %v1055, %v1061
    %v1066 = vsub.f32 %v1057, %v1064
    %v1067 = vmul.f32 %v1065, 1.442695
    %v1068 = vpow.pop %v1067
    %v1069 = vmul.f32 %v1066, 1.442695
    %v1070 = vpow.pop %v1069
    %v1071 = vsel %vm907, %v1068, 0.0
    %1072 = vadd.xlane.f32.xlu0 %v1071
    %v1073 = vpop.xlane.xlu0 %1072
    %v1074 = vsel %vm907, %v1070, 0.0
    %1075 = vadd.xlane.f32.xlu0 %v1074
    %v1076 = vpop.xlane.xlu0 %1075
    %v1077 = vrcp.pop %v1073
    %v1078 = vrcp.pop %v1076
    %v1079 = vmul.f32 %v1068, %v1077
    %v1080 = vmul.f32 %v1070, %v1078
    %1083 = vrot.lane.b32.xlu0 %v1079, 32
    %v1084 = vpop.permute.xlu0 %1083
    %1085 = vrot.lane.b32.xlu0 %v1080, 32
    %v1086 = vpop.permute.xlu0 %1085
    %vm1089 = vcmask 392448
    %1090 = vst.msk [vmem:[%s13] sm:$0xff] %vm1089, %v1084
    %1091 = vst.msk [vmem:[%s13 + $0x8] sm:$0xff] %vm1089, %v1086
    %v1092 = vpack.c.bf16 %v1080, %v1079
    %v1095 = vunpack.c.l.b16 %v872
    %v1096 = vunpack.c.l.b16 %v874
    %v1097 = vpack.c.b16 %v1096, %v1095
    %v1100 = vsel %vm907, %v1092, 0
    %1102 = vmatpush.bf16.msra.mxu0 0
    %1103 = vmatpush.bf16.msra.mxu0 0
    %1104 = vmatpush.bf16.msra.mxu0 0
    %1105 = vmatpush.bf16.msra.mxu0 0
    %1106 = vmatpush.bf16.msra.mxu0 0
    %1107 = vmatpush.bf16.msra.mxu0 0
    %1108 = vmatpush.bf16.msra.mxu0 0
    %1109 = vmatpush.bf16.msra.mxu0 %v1097
    %1110 = vmatmul.bf16.gmra.mxu0 %v1100
    %v1111 = vpop.f32.mrf.mxu0
    %v1112 = vadd.f32 0.0, %v1111
    %v1113 = vpop.f32.mrf.mxu0
    %v1114 = vadd.f32 0.0, %v1113
    %1115 = vdwg.mxu0
    %v1116 = vunpack.c.h.b16 %v856
    %v1117 = vunpack.c.h.b16 %v858
    %v1118 = vpack.c.b16 %v1117, %v1116
    %v1120 = vunpack.c.h.b16 %v864
    %v1121 = vunpack.c.h.b16 %v866
    %v1122 = vpack.c.b16 %v1121, %v1120
    %1124 = vmatpush.bf16.xpose.msra.mxu0 0
    %1125 = vmatpush.bf16.xpose.msra.mxu0 0
    %1126 = vmatpush.bf16.xpose.msra.mxu0 0
    %1127 = vmatpush.bf16.xpose.msra.mxu0 0
    %1128 = vmatpush.bf16.xpose.msra.mxu0 0
    %1129 = vmatpush.bf16.xpose.msra.mxu0 0
    %1130 = vmatpush.bf16.xpose.msra.mxu0 0
    %1131 = vmatpush.bf16.xpose.msra.mxu0 %v1122
    %1132 = vmatmul.bf16.gmra.mxu0 %v1118
    %v1133 = vpop.f32.mrf.mxu0
    %v1134 = vadd.f32 %v879, %v1133
    %v1135 = vpop.f32.mrf.mxu0
    %v1136 = vadd.f32 %v880, %v1135
    %1137 = vdwg.mxu0
    %v1138 = vsel %vm907, %v1134, -inf
    %1139 = vmax.xlane.f32.xlu0 %v1138
    %v1140 = vpop.xlane.xlu0 %1139
    %v1141 = vsel %vm907, %v1136, -inf
    %1142 = vmax.xlane.f32.xlu0 %v1141
    %v1143 = vpop.xlane.xlu0 %1142
    %v1144 = vsub.f32 %v1134, %v1140
    %v1145 = vsub.f32 %v1136, %v1143
    %v1146 = vmul.f32 %v1144, 1.442695
    %v1147 = vpow.pop %v1146
    %v1148 = vmul.f32 %v1145, 1.442695
    %v1149 = vpow.pop %v1148
    %v1150 = vsel %vm907, %v1147, 0.0
    %1151 = vadd.xlane.f32.xlu0 %v1150
    %v1152 = vpop.xlane.xlu0 %1151
    %v1153 = vsel %vm907, %v1149, 0.0
    %1154 = vadd.xlane.f32.xlu0 %v1153
    %v1155 = vpop.xlane.xlu0 %1154
    %v1156 = vrcp.pop %v1152
    %v1157 = vrcp.pop %v1155
    %v1158 = vmul.f32 %v1147, %v1156
    %v1159 = vmul.f32 %v1149, %v1157
    %1162 = vrot.lane.b32.xlu0 %v1158, 48
    %v1163 = vpop.permute.xlu0 %1162
    %1164 = vrot.lane.b32.xlu0 %v1159, 48
    %v1165 = vpop.permute.xlu0 %1164
    %vm1168 = vcmask 523648
    %1169 = vst.msk [vmem:[%s13] sm:$0xff] %vm1168, %v1163
    %1170 = vst.msk [vmem:[%s13 + $0x8] sm:$0xff] %vm1168, %v1165
    %v1171 = vpack.c.bf16 %v1159, %v1158
    %v1172 = vunpack.c.h.b16 %v872
    %v1173 = vunpack.c.h.b16 %v874
    %v1174 = vpack.c.b16 %v1173, %v1172
    %v1177 = vsel %vm907, %v1171, 0
    %1179 = vmatpush.bf16.msra.mxu0 0
    %1180 = vmatpush.bf16.msra.mxu0 0
    %1181 = vmatpush.bf16.msra.mxu0 0
    %1182 = vmatpush.bf16.msra.mxu0 0
    %1183 = vmatpush.bf16.msra.mxu0 0
    %1184 = vmatpush.bf16.msra.mxu0 0
    %1185 = vmatpush.bf16.msra.mxu0 0
    %1186 = vmatpush.bf16.msra.mxu0 %v1174
    %1187 = vmatmul.bf16.gmra.mxu0 %v1177
    %v1188 = vpop.f32.mrf.mxu0
    %v1189 = vadd.f32 0.0, %v1188
    %v1190 = vpop.f32.mrf.mxu0
    %v1191 = vadd.f32 0.0, %v1190
    %1192 = vdwg.mxu0
    %s1193 = scalar_lea.vmem %s1, 16
    %v1194 = vld [vmem:[%s1193] sm:$0xff]
    %v1195 = vld [vmem:[%s1193 + $0x8] sm:$0xff]
    %v1198 = vunpack.c.l.b16 %v859
    %v1199 = vunpack.c.l.b16 %v861
    %v1200 = vpack.c.b16 %v1199, %v1198
    %v1204 = vunpack.c.l.b16 %v867
    %v1205 = vunpack.c.l.b16 %v869
    %v1206 = vpack.c.b16 %v1205, %v1204
    %1208 = vmatpush.bf16.xpose.msra.mxu0 0
    %1209 = vmatpush.bf16.xpose.msra.mxu0 0
    %1210 = vmatpush.bf16.xpose.msra.mxu0 0
    %1211 = vmatpush.bf16.xpose.msra.mxu0 0
    %1212 = vmatpush.bf16.xpose.msra.mxu0 0
    %1213 = vmatpush.bf16.xpose.msra.mxu0 0
    %1214 = vmatpush.bf16.xpose.msra.mxu0 0
    %1215 = vmatpush.bf16.xpose.msra.mxu0 %v1206
    %1216 = vmatmul.bf16.gmra.mxu0 %v1200
    %v1217 = vpop.f32.mrf.mxu0
    %v1218 = vadd.f32 %v1194, %v1217
    %v1219 = vpop.f32.mrf.mxu0
    %v1220 = vadd.f32 %v1195, %v1219
    %1221 = vdwg.mxu0
    %v1222 = vsel %vm907, %v1218, -inf
    %1223 = vmax.xlane.f32.xlu0 %v1222
    %v1224 = vpop.xlane.xlu0 %1223
    %v1225 = vsel %vm907, %v1220, -inf
    %1226 = vmax.xlane.f32.xlu0 %v1225
    %v1227 = vpop.xlane.xlu0 %1226
    %v1228 = vsub.f32 %v1218, %v1224
    %v1229 = vsub.f32 %v1220, %v1227
    %v1230 = vmul.f32 %v1228, 1.442695
    %v1231 = vpow.pop %v1230
    %v1232 = vmul.f32 %v1229, 1.442695
    %v1233 = vpow.pop %v1232
    %v1234 = vsel %vm907, %v1231, 0.0
    %1235 = vadd.xlane.f32.xlu0 %v1234
    %v1236 = vpop.xlane.xlu0 %1235
    %v1237 = vsel %vm907, %v1233, 0.0
    %1238 = vadd.xlane.f32.xlu0 %v1237
    %v1239 = vpop.xlane.xlu0 %1238
    %v1240 = vrcp.pop %v1236
    %v1241 = vrcp.pop %v1239
    %v1242 = vmul.f32 %v1231, %v1240
    %v1243 = vmul.f32 %v1233, %v1241
    %1246 = vrot.lane.b32.xlu0 %v1242, 64
    %v1247 = vpop.permute.xlu0 %1246
    %1248 = vrot.lane.b32.xlu0 %v1243, 64
    %v1249 = vpop.permute.xlu0 %1248
    %vm1252 = vcmask 654848
    %1253 = vst.msk [vmem:[%s13] sm:$0xff] %vm1252, %v1247
    %1254 = vst.msk [vmem:[%s13 + $0x8] sm:$0xff] %vm1252, %v1249
    %v1255 = vpack.c.bf16 %v1243, %v1242
    %v1258 = vunpack.c.l.b16 %v875
    %v1259 = vunpack.c.l.b16 %v877
    %v1260 = vpack.c.b16 %v1259, %v1258
    %v1263 = vsel %vm907, %v1255, 0
    %1265 = vmatpush.bf16.msra.mxu0 0
    %1266 = vmatpush.bf16.msra.mxu0 0
    %1267 = vmatpush.bf16.msra.mxu0 0
    %1268 = vmatpush.bf16.msra.mxu0 0
    %1269 = vmatpush.bf16.msra.mxu0 0
    %1270 = vmatpush.bf16.msra.mxu0 0
    %1271 = vmatpush.bf16.msra.mxu0 0
    %1272 = vmatpush.bf16.msra.mxu0 %v1260
    %1273 = vmatmul.bf16.gmra.mxu0 %v1263
    %v1274 = vpop.f32.mrf.mxu0
    %v1275 = vadd.f32 0.0, %v1274
    %v1276 = vpop.f32.mrf.mxu0
    %v1277 = vadd.f32 0.0, %v1276
    %1278 = vdwg.mxu0
    %v1279 = vunpack.c.h.b16 %v859
    %v1280 = vunpack.c.h.b16 %v861
    %v1281 = vpack.c.b16 %v1280, %v1279
    %v1283 = vunpack.c.h.b16 %v867
    %v1284 = vunpack.c.h.b16 %v869
    %v1285 = vpack.c.b16 %v1284, %v1283
    %1287 = vmatpush.bf16.xpose.msra.mxu0 0
    %1288 = vmatpush.bf16.xpose.msra.mxu0 0
    %1289 = vmatpush.bf16.xpose.msra.mxu0 0
    %1290 = vmatpush.bf16.xpose.msra.mxu0 0
    %1291 = vmatpush.bf16.xpose.msra.mxu0 0
    %1292 = vmatpush.bf16.xpose.msra.mxu0 0
    %1293 = vmatpush.bf16.xpose.msra.mxu0 0
    %1294 = vmatpush.bf16.xpose.msra.mxu0 %v1285
    %1295 = vmatmul.bf16.gmra.mxu0 %v1281
    %v1296 = vpop.f32.mrf.mxu0
    %v1297 = vadd.f32 %v1194, %v1296
    %v1298 = vpop.f32.mrf.mxu0
    %v1299 = vadd.f32 %v1195, %v1298
    %1300 = vdwg.mxu0
    %v1301 = vsel %vm907, %v1297, -inf
    %1302 = vmax.xlane.f32.xlu0 %v1301
    %v1303 = vpop.xlane.xlu0 %1302
    %v1304 = vsel %vm907, %v1299, -inf
    %1305 = vmax.xlane.f32.xlu0 %v1304
    %v1306 = vpop.xlane.xlu0 %1305
    %v1307 = vsub.f32 %v1297, %v1303
    %v1308 = vsub.f32 %v1299, %v1306
    %v1309 = vmul.f32 %v1307, 1.442695
    %v1310 = vpow.pop %v1309
    %v1311 = vmul.f32 %v1308, 1.442695
    %v1312 = vpow.pop %v1311
    %v1313 = vsel %vm907, %v1310, 0.0
    %1314 = vadd.xlane.f32.xlu0 %v1313
    %v1315 = vpop.xlane.xlu0 %1314
    %v1316 = vsel %vm907, %v1312, 0.0
    %1317 = vadd.xlane.f32.xlu0 %v1316
    %v1318 = vpop.xlane.xlu0 %1317
    %v1319 = vrcp.pop %v1315
    %v1320 = vrcp.pop %v1318
    %v1321 = vmul.f32 %v1310, %v1319
    %v1322 = vmul.f32 %v1312, %v1320
    %1325 = vrot.lane.b32.xlu0 %v1321, 80
    %v1326 = vpop.permute.xlu0 %1325
    %1327 = vrot.lane.b32.xlu0 %v1322, 80
    %v1328 = vpop.permute.xlu0 %1327
    %vm1331 = vcmask 786048
    %1332 = vst.msk [vmem:[%s13] sm:$0xff] %vm1331, %v1326
    %1333 = vst.msk [vmem:[%s13 + $0x8] sm:$0xff] %vm1331, %v1328
    %v1334 = vpack.c.bf16 %v1322, %v1321
    %v1335 = vunpack.c.h.b16 %v875
    %v1336 = vunpack.c.h.b16 %v877
    %v1337 = vpack.c.b16 %v1336, %v1335
    %v1340 = vsel %vm907, %v1334, 0
    %1342 = vmatpush.bf16.msra.mxu0 0
    %1343 = vmatpush.bf16.msra.mxu0 0
    %1344 = vmatpush.bf16.msra.mxu0 0
    %1345 = vmatpush.bf16.msra.mxu0 0
    %1346 = vmatpush.bf16.msra.mxu0 0
    %1347 = vmatpush.bf16.msra.mxu0 0
    %1348 = vmatpush.bf16.msra.mxu0 0
    %1349 = vmatpush.bf16.msra.mxu0 %v1337
    %1350 = vmatmul.bf16.gmra.mxu0 %v1340
    %v1351 = vpop.f32.mrf.mxu0
    %v1352 = vadd.f32 0.0, %v1351
    %v1353 = vpop.f32.mrf.mxu0
    %v1354 = vadd.f32 0.0, %v1353
    %1355 = vdwg.mxu0
    %v1358 = vunpack.c.l.b16 %v860
    %v1359 = vunpack.c.l.b16 %v862
    %v1360 = vpack.c.b16 %v1359, %v1358
    %v1364 = vunpack.c.l.b16 %v868
    %v1365 = vunpack.c.l.b16 %v870
    %v1366 = vpack.c.b16 %v1365, %v1364
    %1368 = vmatpush.bf16.xpose.msra.mxu0 0
    %1369 = vmatpush.bf16.xpose.msra.mxu0 0
    %1370 = vmatpush.bf16.xpose.msra.mxu0 0
    %1371 = vmatpush.bf16.xpose.msra.mxu0 0
    %1372 = vmatpush.bf16.xpose.msra.mxu0 0
    %1373 = vmatpush.bf16.xpose.msra.mxu0 0
    %1374 = vmatpush.bf16.xpose.msra.mxu0 0
    %1375 = vmatpush.bf16.xpose.msra.mxu0 %v1366
    %1376 = vmatmul.bf16.gmra.mxu0 %v1360
    %v1377 = vpop.f32.mrf.mxu0
    %v1378 = vadd.f32 %v1194, %v1377
    %v1379 = vpop.f32.mrf.mxu0
    %v1380 = vadd.f32 %v1195, %v1379
    %1381 = vdwg.mxu0
    %v1382 = vsel %vm907, %v1378, -inf
    %1383 = vmax.xlane.f32.xlu0 %v1382
    %v1384 = vpop.xlane.xlu0 %1383
    %v1385 = vsel %vm907, %v1380, -inf
    %1386 = vmax.xlane.f32.xlu0 %v1385
    %v1387 = vpop.xlane.xlu0 %1386
    %v1388 = vsub.f32 %v1378, %v1384
    %v1389 = vsub.f32 %v1380, %v1387
    %v1390 = vmul.f32 %v1388, 1.442695
    %v1391 = vpow.pop %v1390
    %v1392 = vmul.f32 %v1389, 1.442695
    %v1393 = vpow.pop %v1392
    %v1394 = vsel %vm907, %v1391, 0.0
    %1395 = vadd.xlane.f32.xlu0 %v1394
    %v1396 = vpop.xlane.xlu0 %1395
    %v1397 = vsel %vm907, %v1393, 0.0
    %1398 = vadd.xlane.f32.xlu0 %v1397
    %v1399 = vpop.xlane.xlu0 %1398
    %v1400 = vrcp.pop %v1396
    %v1401 = vrcp.pop %v1399
    %v1402 = vmul.f32 %v1391, %v1400
    %v1403 = vmul.f32 %v1393, %v1401
    %1406 = vrot.lane.b32.xlu0 %v1402, 96
    %v1407 = vpop.permute.xlu0 %1406
    %1408 = vrot.lane.b32.xlu0 %v1403, 96
    %v1409 = vpop.permute.xlu0 %1408
    %vm1412 = vcmask 917248
    %1413 = vst.msk [vmem:[%s13] sm:$0xff] %vm1412, %v1407
    %1414 = vst.msk [vmem:[%s13 + $0x8] sm:$0xff] %vm1412, %v1409
    %v1415 = vpack.c.bf16 %v1403, %v1402
    %v1418 = vunpack.c.l.b16 %v876
    %v1419 = vunpack.c.l.b16 %v878
    %v1420 = vpack.c.b16 %v1419, %v1418
    %v1423 = vsel %vm907, %v1415, 0
    %1425 = vmatpush.bf16.msra.mxu0 0
    %1426 = vmatpush.bf16.msra.mxu0 0
    %1427 = vmatpush.bf16.msra.mxu0 0
    %1428 = vmatpush.bf16.msra.mxu0 0
    %1429 = vmatpush.bf16.msra.mxu0 0
    %1430 = vmatpush.bf16.msra.mxu0 0
    %1431 = vmatpush.bf16.msra.mxu0 0
    %1432 = vmatpush.bf16.msra.mxu0 %v1420
    %1433 = vmatmul.bf16.gmra.mxu0 %v1423
    %v1434 = vpop.f32.mrf.mxu0
    %v1435 = vadd.f32 0.0, %v1434
    %v1436 = vpop.f32.mrf.mxu0
    %v1437 = vadd.f32 0.0, %v1436
    %1438 = vdwg.mxu0
    %v1439 = vunpack.c.h.b16 %v860
    %v1440 = vunpack.c.h.b16 %v862
    %v1441 = vpack.c.b16 %v1440, %v1439
    %v1443 = vunpack.c.h.b16 %v868
    %v1444 = vunpack.c.h.b16 %v870
    %v1445 = vpack.c.b16 %v1444, %v1443
    %1447 = vmatpush.bf16.xpose.msra.mxu0 0
    %1448 = vmatpush.bf16.xpose.msra.mxu0 0
    %1449 = vmatpush.bf16.xpose.msra.mxu0 0
    %1450 = vmatpush.bf16.xpose.msra.mxu0 0
    %1451 = vmatpush.bf16.xpose.msra.mxu0 0
    %1452 = vmatpush.bf16.xpose.msra.mxu0 0
    %1453 = vmatpush.bf16.xpose.msra.mxu0 0
    %1454 = vmatpush.bf16.xpose.msra.mxu0 %v1445
    %1455 = vmatmul.bf16.gmra.mxu0 %v1441
    %v1456 = vpop.f32.mrf.mxu0
    %v1457 = vadd.f32 %v1194, %v1456
    %v1458 = vpop.f32.mrf.mxu0
    %v1459 = vadd.f32 %v1195, %v1458
    %1460 = vdwg.mxu0
    %v1461 = vsel %vm907, %v1457, -inf
    %1462 = vmax.xlane.f32.xlu0 %v1461
    %v1463 = vpop.xlane.xlu0 %1462
    %v1464 = vsel %vm907, %v1459, -inf
    %1465 = vmax.xlane.f32.xlu0 %v1464
    %v1466 = vpop.xlane.xlu0 %1465
    %v1467 = vsub.f32 %v1457, %v1463
    %v1468 = vsub.f32 %v1459, %v1466
    %v1469 = vmul.f32 %v1467, 1.442695
    %v1470 = vpow.pop %v1469
    %v1471 = vmul.f32 %v1468, 1.442695
    %v1472 = vpow.pop %v1471
    %v1473 = vsel %vm907, %v1470, 0.0
    %1474 = vadd.xlane.f32.xlu0 %v1473
    %v1475 = vpop.xlane.xlu0 %1474
    %v1476 = vsel %vm907, %v1472, 0.0
    %1477 = vadd.xlane.f32.xlu0 %v1476
    %v1478 = vpop.xlane.xlu0 %1477
    %v1479 = vrcp.pop %v1475
    %v1480 = vrcp.pop %v1478
    %v1481 = vmul.f32 %v1470, %v1479
    %v1482 = vmul.f32 %v1472, %v1480
    %1485 = vrot.lane.b32.xlu0 %v1481, 112
    %v1486 = vpop.permute.xlu0 %1485
    %1487 = vrot.lane.b32.xlu0 %v1482, 112
    %v1488 = vpop.permute.xlu0 %1487
    %vm1491 = vcmask 1048448
    %1492 = vst.msk [vmem:[%s13] sm:$0xff] %vm1491, %v1486
    %1493 = vst.msk [vmem:[%s13 + $0x8] sm:$0xff] %vm1491, %v1488
    %v1494 = vpack.c.bf16 %v1482, %v1481
    %v1495 = vunpack.c.h.b16 %v876
    %v1496 = vunpack.c.h.b16 %v878
    %v1497 = vpack.c.b16 %v1496, %v1495
    %v1500 = vsel %vm907, %v1494, 0
    %1502 = vmatpush.bf16.msra.mxu0 0
    %1503 = vmatpush.bf16.msra.mxu0 0
    %1504 = vmatpush.bf16.msra.mxu0 0
    %1505 = vmatpush.bf16.msra.mxu0 0
    %1506 = vmatpush.bf16.msra.mxu0 0
    %1507 = vmatpush.bf16.msra.mxu0 0
    %1508 = vmatpush.bf16.msra.mxu0 0
    %1509 = vmatpush.bf16.msra.mxu0 %v1497
    %1510 = vmatmul.bf16.gmra.mxu0 %v1500
    %v1511 = vpop.f32.mrf.mxu0
    %v1512 = vadd.f32 0.0, %v1511
    %v1513 = vpop.f32.mrf.mxu0
    %v1514 = vadd.f32 0.0, %v1513
    %1515 = vdwg.mxu0
    %v1516 = vpack.c.bf16 %v954, %v952
    %v1517 = vpack.c.bf16 %v1031, %v1029
    %v1518 = vpack.c.bf16 %v1114, %v1112
    %v1519 = vpack.c.bf16 %v1191, %v1189
    %v1520 = vpack.c.bf16 %v1277, %v1275
    %v1521 = vpack.c.bf16 %v1354, %v1352
    %v1522 = vpack.c.bf16 %v1437, %v1435
    %v1523 = vpack.c.bf16 %v1514, %v1512
    %v1524 = vld [vmem:[%s5] sm:$0xf]
    %v1525 = vld [vmem:[%s5 + $0x4] sm:$0xf]
    %v1526 = vld [vmem:[%s5 + $0x8] sm:$0xf]
    %v1527 = vld [vmem:[%s5 + $0xc] sm:$0xf]
    %v1528 = vld [vmem:[%s5 + $0x10] sm:$0xf]
    %v1529 = vld [vmem:[%s5 + $0x14] sm:$0xf]
    %v1530 = vld [vmem:[%s5 + $0x18] sm:$0xf]
    %v1531 = vld [vmem:[%s5 + $0x1c] sm:$0xf]
    %v1532 = vld [vmem:[%s5 + $0x20] sm:$0xf]
    %v1533 = vld [vmem:[%s5 + $0x24] sm:$0xf]
    %v1534 = vld [vmem:[%s5 + $0x28] sm:$0xf]
    %v1535 = vld [vmem:[%s5 + $0x2c] sm:$0xf]
    %v1536 = vld [vmem:[%s5 + $0x30] sm:$0xf]
    %v1537 = vld [vmem:[%s5 + $0x34] sm:$0xf]
    %v1538 = vld [vmem:[%s5 + $0x38] sm:$0xf]
    %v1539 = vld [vmem:[%s5 + $0x3c] sm:$0xf]
    %v1540 = vld [vmem:[%s5 + $0x40] sm:$0xf]
    %v1541 = vld [vmem:[%s5 + $0x44] sm:$0xf]
    %v1542 = vld [vmem:[%s5 + $0x48] sm:$0xf]
    %v1543 = vld [vmem:[%s5 + $0x4c] sm:$0xf]
    %v1544 = vld [vmem:[%s5 + $0x50] sm:$0xf]
    %v1545 = vld [vmem:[%s5 + $0x54] sm:$0xf]
    %v1546 = vld [vmem:[%s5 + $0x58] sm:$0xf]
    %v1547 = vld [vmem:[%s5 + $0x5c] sm:$0xf]
    %v1548 = vld [vmem:[%s5 + $0x60] sm:$0xf]
    %v1549 = vld [vmem:[%s5 + $0x64] sm:$0xf]
    %v1550 = vld [vmem:[%s5 + $0x68] sm:$0xf]
    %v1551 = vld [vmem:[%s5 + $0x6c] sm:$0xf]
    %v1552 = vld [vmem:[%s5 + $0x70] sm:$0xf]
    %v1553 = vld [vmem:[%s5 + $0x74] sm:$0xf]
    %v1554 = vld [vmem:[%s5 + $0x78] sm:$0xf]
    %v1555 = vld [vmem:[%s5 + $0x7c] sm:$0xf]
    %v1556 = vld [vmem:[%s5 + $0x80] sm:$0xf]
    %v1557 = vld [vmem:[%s5 + $0x84] sm:$0xf]
    %v1558 = vld [vmem:[%s5 + $0x88] sm:$0xf]
    %v1559 = vld [vmem:[%s5 + $0x8c] sm:$0xf]
    %v1560 = vld [vmem:[%s5 + $0x90] sm:$0xf]
    %v1561 = vld [vmem:[%s5 + $0x94] sm:$0xf]
    %v1562 = vld [vmem:[%s5 + $0x98] sm:$0xf]
    %v1563 = vld [vmem:[%s5 + $0x9c] sm:$0xf]
    %v1564 = vld [vmem:[%s5 + $0xa0] sm:$0xf]
    %v1565 = vld [vmem:[%s5 + $0xa4] sm:$0xf]
    %v1566 = vld [vmem:[%s5 + $0xa8] sm:$0xf]
    %v1567 = vld [vmem:[%s5 + $0xac] sm:$0xf]
    %v1568 = vld [vmem:[%s5 + $0xb0] sm:$0xf]
    %v1569 = vld [vmem:[%s5 + $0xb4] sm:$0xf]
    %v1570 = vld [vmem:[%s5 + $0xb8] sm:$0xf]
    %v1571 = vld [vmem:[%s5 + $0xbc] sm:$0xf]
    %v1572 = vld [vmem:[%s5 + $0xc0] sm:$0xf]
    %v1573 = vld [vmem:[%s5 + $0xc4] sm:$0xf]
    %v1574 = vld [vmem:[%s5 + $0xc8] sm:$0xf]
    %v1575 = vld [vmem:[%s5 + $0xcc] sm:$0xf]
    %v1576 = vld [vmem:[%s5 + $0xd0] sm:$0xf]
    %v1577 = vld [vmem:[%s5 + $0xd4] sm:$0xf]
    %v1578 = vld [vmem:[%s5 + $0xd8] sm:$0xf]
    %v1579 = vld [vmem:[%s5 + $0xdc] sm:$0xf]
    %v1580 = vld [vmem:[%s5 + $0xe0] sm:$0xf]
    %v1581 = vld [vmem:[%s5 + $0xe4] sm:$0xf]
    %v1582 = vld [vmem:[%s5 + $0xe8] sm:$0xf]
    %v1583 = vld [vmem:[%s5 + $0xec] sm:$0xf]
    %v1584 = vld [vmem:[%s5 + $0xf0] sm:$0xf]
    %v1585 = vld [vmem:[%s5 + $0xf4] sm:$0xf]
    %v1586 = vld [vmem:[%s5 + $0xf8] sm:$0xf]
    %v1587 = vld [vmem:[%s5 + $0xfc] sm:$0xf]
    %v1652 = vunpack.c.l.b16 %v1524
    %v1653 = vunpack.c.l.b16 %v1525
    %v1654 = vunpack.c.l.b16 %v1526
    %v1655 = vunpack.c.l.b16 %v1527
    %v1656 = vunpack.c.l.b16 %v1528
    %v1657 = vunpack.c.l.b16 %v1529
    %v1658 = vunpack.c.l.b16 %v1530
    %v1659 = vunpack.c.l.b16 %v1531
    %v1660 = vunpack.c.l.b16 %v1532
    %v1661 = vunpack.c.l.b16 %v1533
    %v1662 = vunpack.c.l.b16 %v1534
    %v1663 = vunpack.c.l.b16 %v1535
    %v1664 = vunpack.c.l.b16 %v1536
    %v1665 = vunpack.c.l.b16 %v1537
    %v1666 = vunpack.c.l.b16 %v1538
    %v1667 = vunpack.c.l.b16 %v1539
    %v1668 = vunpack.c.l.b16 %v1540
    %v1669 = vunpack.c.l.b16 %v1541
    %v1670 = vunpack.c.l.b16 %v1542
    %v1671 = vunpack.c.l.b16 %v1543
    %v1672 = vunpack.c.l.b16 %v1544
    %v1673 = vunpack.c.l.b16 %v1545
    %v1674 = vunpack.c.l.b16 %v1546
    %v1675 = vunpack.c.l.b16 %v1547
    %v1676 = vunpack.c.l.b16 %v1548
    %v1677 = vunpack.c.l.b16 %v1549
    %v1678 = vunpack.c.l.b16 %v1550
    %v1679 = vunpack.c.l.b16 %v1551
    %v1680 = vunpack.c.l.b16 %v1552
    %v1681 = vunpack.c.l.b16 %v1553
    %v1682 = vunpack.c.l.b16 %v1554
    %v1683 = vunpack.c.l.b16 %v1555
    %v1684 = vunpack.c.l.b16 %v1556
    %v1685 = vunpack.c.l.b16 %v1557
    %v1686 = vunpack.c.l.b16 %v1558
    %v1687 = vunpack.c.l.b16 %v1559
    %v1688 = vunpack.c.l.b16 %v1560
    %v1689 = vunpack.c.l.b16 %v1561
    %v1690 = vunpack.c.l.b16 %v1562
    %v1691 = vunpack.c.l.b16 %v1563
    %v1692 = vunpack.c.l.b16 %v1564
    %v1693 = vunpack.c.l.b16 %v1565
    %v1694 = vunpack.c.l.b16 %v1566
    %v1695 = vunpack.c.l.b16 %v1567
    %v1696 = vunpack.c.l.b16 %v1568
    %v1697 = vunpack.c.l.b16 %v1569
    %v1698 = vunpack.c.l.b16 %v1570
    %v1699 = vunpack.c.l.b16 %v1571
    %v1700 = vunpack.c.l.b16 %v1572
    %v1701 = vunpack.c.l.b16 %v1573
    %v1702 = vunpack.c.l.b16 %v1574
    %v1703 = vunpack.c.l.b16 %v1575
    %v1704 = vunpack.c.l.b16 %v1576
    %v1705 = vunpack.c.l.b16 %v1577
    %v1706 = vunpack.c.l.b16 %v1578
    %v1707 = vunpack.c.l.b16 %v1579
    %v1708 = vunpack.c.l.b16 %v1580
    %v1709 = vunpack.c.l.b16 %v1581
    %v1710 = vunpack.c.l.b16 %v1582
    %v1711 = vunpack.c.l.b16 %v1583
    %v1712 = vunpack.c.l.b16 %v1584
    %v1713 = vunpack.c.l.b16 %v1585
    %v1714 = vunpack.c.l.b16 %v1586
    %v1715 = vunpack.c.l.b16 %v1587
    %v1716 = vpack.c.b16 %v1653, %v1652
    %v1717 = vpack.c.b16 %v1655, %v1654
    %v1718 = vpack.c.b16 %v1657, %v1656
    %v1719 = vpack.c.b16 %v1659, %v1658
    %v1720 = vpack.c.b16 %v1661, %v1660
    %v1721 = vpack.c.b16 %v1663, %v1662
    %v1722 = vpack.c.b16 %v1665, %v1664
    %v1723 = vpack.c.b16 %v1667, %v1666
    %v1724 = vpack.c.b16 %v1669, %v1668
    %v1725 = vpack.c.b16 %v1671, %v1670
    %v1726 = vpack.c.b16 %v1673, %v1672
    %v1727 = vpack.c.b16 %v1675, %v1674
    %v1728 = vpack.c.b16 %v1677, %v1676
    %v1729 = vpack.c.b16 %v1679, %v1678
    %v1730 = vpack.c.b16 %v1681, %v1680
    %v1731 = vpack.c.b16 %v1683, %v1682
    %v1732 = vpack.c.b16 %v1685, %v1684
    %v1733 = vpack.c.b16 %v1687, %v1686
    %v1734 = vpack.c.b16 %v1689, %v1688
    %v1735 = vpack.c.b16 %v1691, %v1690
    %v1736 = vpack.c.b16 %v1693, %v1692
    %v1737 = vpack.c.b16 %v1695, %v1694
    %v1738 = vpack.c.b16 %v1697, %v1696
    %v1739 = vpack.c.b16 %v1699, %v1698
    %v1740 = vpack.c.b16 %v1701, %v1700
    %v1741 = vpack.c.b16 %v1703, %v1702
    %v1742 = vpack.c.b16 %v1705, %v1704
    %v1743 = vpack.c.b16 %v1707, %v1706
    %v1744 = vpack.c.b16 %v1709, %v1708
    %v1745 = vpack.c.b16 %v1711, %v1710
    %v1746 = vpack.c.b16 %v1713, %v1712
    %v1747 = vpack.c.b16 %v1715, %v1714
    %1780 = vmatpush.bf16.msra.mxu0 %v1723
    %1781 = vmatpush.bf16.msra.mxu0 %v1722
    %1782 = vmatpush.bf16.msra.mxu0 %v1721
    %1783 = vmatpush.bf16.msra.mxu0 %v1720
    %1784 = vmatpush.bf16.msra.mxu0 %v1719
    %1785 = vmatpush.bf16.msra.mxu0 %v1718
    %1786 = vmatpush.bf16.msra.mxu0 %v1717
    %1787 = vmatpush.bf16.msra.mxu0 %v1716
    %1788 = vmatmul.bf16.gmra.mxu0 %v1516
    %v1789 = vpop.f32.mrf.mxu0
    %v1790 = vadd.f32 %v45, %v1789
    %v1791 = vpop.f32.mrf.mxu0
    %v1792 = vadd.f32 %v46, %v1791
    %1793 = vmatmul.bf16.gmra.mxu0 %v1520
    %v1794 = vpop.f32.mrf.mxu0
    %v1795 = vadd.f32 %v47, %v1794
    %v1796 = vpop.f32.mrf.mxu0
    %v1797 = vadd.f32 %v48, %v1796
    %1798 = vdwg.mxu0
    %1799 = vmatpush.bf16.msra.mxu0 %v1731
    %1800 = vmatpush.bf16.msra.mxu0 %v1730
    %1801 = vmatpush.bf16.msra.mxu0 %v1729
    %1802 = vmatpush.bf16.msra.mxu0 %v1728
    %1803 = vmatpush.bf16.msra.mxu0 %v1727
    %1804 = vmatpush.bf16.msra.mxu0 %v1726
    %1805 = vmatpush.bf16.msra.mxu0 %v1725
    %1806 = vmatpush.bf16.msra.mxu0 %v1724
    %1807 = vmatmul.bf16.gmra.mxu0 %v1517
    %v1808 = vpop.f32.mrf.mxu0
    %v1809 = vadd.f32 %v1790, %v1808
    %v1810 = vpop.f32.mrf.mxu0
    %v1811 = vadd.f32 %v1792, %v1810
    %1812 = vmatmul.bf16.gmra.mxu0 %v1521
    %v1813 = vpop.f32.mrf.mxu0
    %v1814 = vadd.f32 %v1795, %v1813
    %v1815 = vpop.f32.mrf.mxu0
    %v1816 = vadd.f32 %v1797, %v1815
    %1817 = vdwg.mxu0
    %1818 = vmatpush.bf16.msra.mxu0 %v1739
    %1819 = vmatpush.bf16.msra.mxu0 %v1738
    %1820 = vmatpush.bf16.msra.mxu0 %v1737
    %1821 = vmatpush.bf16.msra.mxu0 %v1736
    %1822 = vmatpush.bf16.msra.mxu0 %v1735
    %1823 = vmatpush.bf16.msra.mxu0 %v1734
    %1824 = vmatpush.bf16.msra.mxu0 %v1733
    %1825 = vmatpush.bf16.msra.mxu0 %v1732
    %1826 = vmatmul.bf16.gmra.mxu0 %v1518
    %v1827 = vpop.f32.mrf.mxu0
    %v1828 = vadd.f32 %v1809, %v1827
    %v1829 = vpop.f32.mrf.mxu0
    %v1830 = vadd.f32 %v1811, %v1829
    %1831 = vmatmul.bf16.gmra.mxu0 %v1522
    %v1832 = vpop.f32.mrf.mxu0
    %v1833 = vadd.f32 %v1814, %v1832
    %v1834 = vpop.f32.mrf.mxu0
    %v1835 = vadd.f32 %v1816, %v1834
    %1836 = vdwg.mxu0
    %1837 = vmatpush.bf16.msra.mxu0 %v1747
    %1838 = vmatpush.bf16.msra.mxu0 %v1746
    %1839 = vmatpush.bf16.msra.mxu0 %v1745
    %1840 = vmatpush.bf16.msra.mxu0 %v1744
    %1841 = vmatpush.bf16.msra.mxu0 %v1743
    %1842 = vmatpush.bf16.msra.mxu0 %v1742
    %1843 = vmatpush.bf16.msra.mxu0 %v1741
    %1844 = vmatpush.bf16.msra.mxu0 %v1740
    %1845 = vmatmul.bf16.gmra.mxu0 %v1519
    %v1846 = vpop.f32.mrf.mxu0
    %v1847 = vadd.f32 %v1828, %v1846
    %v1848 = vpop.f32.mrf.mxu0
    %v1849 = vadd.f32 %v1830, %v1848
    %1850 = vmatmul.bf16.gmra.mxu0 %v1523
    %v1851 = vpop.f32.mrf.mxu0
    %v1852 = vadd.f32 %v1833, %v1851
    %v1853 = vpop.f32.mrf.mxu0
    %v1854 = vadd.f32 %v1835, %v1853
    %1855 = vdwg.mxu0
    %v1856 = vld [vmem:[%s6] sm:$0x1]
    %v1857 = vld [vmem:[%s7] sm:$0x1]
    %1858 = vadd.xlane.f32.xlu0 %v1847
    %v1859 = vpop.xlane.xlu0 %1858
    %1860 = vadd.xlane.f32.xlu0 %v1849
    %v1861 = vpop.xlane.xlu0 %1860
    %1862 = vadd.xlane.f32.xlu0 %v1852
    %v1863 = vpop.xlane.xlu0 %1862
    %1864 = vadd.xlane.f32.xlu0 %v1854
    %v1865 = vpop.xlane.xlu0 %1864
    %v1866 = vrcp.pop 128.0
    %v1867 = vmul.f32 128.0, %v1866
    %v1868 = vsub.f32 1.0, %v1867
    %v1869 = vmul.f32 %v1866, %v1868
    %v1870 = vadd.f32 %v1866, %v1869
    %vm1871 = vweird.f32 %v1866
    %v1872 = vsel %vm1871, %v1866, %v1870
    %v1873 = vmul.f32 %v1859, %v1872
    %v1874 = vmul.f32 %v1861, %v1872
    %v1875 = vmul.f32 %v1863, %v1872
    %v1876 = vmul.f32 %v1865, %v1872
    %v1877 = vmul.f32 %v1847, %v1847
    %v1878 = vmul.f32 %v1849, %v1849
    %v1879 = vmul.f32 %v1852, %v1852
    %v1880 = vmul.f32 %v1854, %v1854
    %1881 = vadd.xlane.f32.xlu0 %v1877
    %v1882 = vpop.xlane.xlu0 %1881
    %1883 = vadd.xlane.f32.xlu0 %v1878
    %v1884 = vpop.xlane.xlu0 %1883
    %1885 = vadd.xlane.f32.xlu0 %v1879
    %v1886 = vpop.xlane.xlu0 %1885
    %1887 = vadd.xlane.f32.xlu0 %v1880
    %v1888 = vpop.xlane.xlu0 %1887
    %v1889 = vmul.f32 %v1882, %v1872
    %v1890 = vmul.f32 %v1884, %v1872
    %v1891 = vmul.f32 %v1886, %v1872
    %v1892 = vmul.f32 %v1888, %v1872
    %v1893 = vmul.f32 %v1873, %v1873
    %v1894 = vmul.f32 %v1874, %v1874
    %v1895 = vmul.f32 %v1875, %v1875
    %v1896 = vmul.f32 %v1876, %v1876
    %v1897 = vsub.f32 %v1889, %v1893
    %v1898 = vsub.f32 %v1890, %v1894
    %v1899 = vsub.f32 %v1891, %v1895
    %v1900 = vsub.f32 %v1892, %v1896
    %v1901 = vadd.f32 %v1897, 1e-05
    %v1902 = vadd.f32 %v1898, 1e-05
    %v1903 = vadd.f32 %v1899, 1e-05
    %v1904 = vadd.f32 %v1900, 1e-05
    %v1905 = vrsqrt.pop %v1901
    %v1906 = vmul.f32 %v1905, %v1901
    %v1907 = vmul.f32 %v1906, %v1905
    %v1908 = vmul.f32 0.5, %v1907
    %v1909 = vsub.f32 1.5, %v1908
    %v1910 = vmul.f32 %v1905, %v1909
    %vm1911 = vweird.f32 %v1901
    %vm1912 = vweird.f32 %v1905
    %vm1913 = vmor %vm1911, %vm1912
    %v1914 = vsel %vm1913, %v1905, %v1910
    %v1915 = vrsqrt.pop %v1902
    %v1916 = vmul.f32 %v1915, %v1902
    %v1917 = vmul.f32 %v1916, %v1915
    %v1918 = vmul.f32 0.5, %v1917
    %v1919 = vsub.f32 1.5, %v1918
    %v1920 = vmul.f32 %v1915, %v1919
    %vm1921 = vweird.f32 %v1902
    %vm1922 = vweird.f32 %v1915
    %vm1923 = vmor %vm1921, %vm1922
    %v1924 = vsel %vm1923, %v1915, %v1920
    %v1925 = vrsqrt.pop %v1903
    %v1926 = vmul.f32 %v1925, %v1903
    %v1927 = vmul.f32 %v1926, %v1925
    %v1928 = vmul.f32 0.5, %v1927
    %v1929 = vsub.f32 1.5, %v1928
    %v1930 = vmul.f32 %v1925, %v1929
    %vm1931 = vweird.f32 %v1903
    %vm1932 = vweird.f32 %v1925
    %vm1933 = vmor %vm1931, %vm1932
    %v1934 = vsel %vm1933, %v1925, %v1930
    %v1935 = vrsqrt.pop %v1904
    %v1936 = vmul.f32 %v1935, %v1904
    %v1937 = vmul.f32 %v1936, %v1935
    %v1938 = vmul.f32 0.5, %v1937
    %v1939 = vsub.f32 1.5, %v1938
    %v1940 = vmul.f32 %v1935, %v1939
    %vm1941 = vweird.f32 %v1904
    %vm1942 = vweird.f32 %v1935
    %vm1943 = vmor %vm1941, %vm1942
    %v1944 = vsel %vm1943, %v1935, %v1940
    %v1945 = vsub.f32 %v1847, %v1873
    %v1946 = vsub.f32 %v1849, %v1874
    %v1947 = vsub.f32 %v1852, %v1875
    %v1948 = vsub.f32 %v1854, %v1876
    %v1949 = vmul.f32 %v1945, %v1914
    %v1950 = vmul.f32 %v1946, %v1924
    %v1951 = vmul.f32 %v1947, %v1934
    %v1952 = vmul.f32 %v1948, %v1944
    %v1954 = vperm.slane %v1856, 0
    %v1956 = vmul.f32 %v1949, %v1954
    %v1957 = vmul.f32 %v1950, %v1954
    %v1958 = vmul.f32 %v1951, %v1954
    %v1959 = vmul.f32 %v1952, %v1954
    %v1961 = vperm.slane %v1857, 0
    %v1963 = vadd.f32 %v1956, %v1961
    %v1964 = vadd.f32 %v1957, %v1961
    %v1965 = vadd.f32 %v1958, %v1961
    %v1966 = vadd.f32 %v1959, %v1961
    %v1967 = vpack.c.bf16 %v1964, %v1963
    %v1968 = vpack.c.bf16 %v1966, %v1965
    %v1969 = vld [vmem:[%s8] sm:$0xff]
    %v1970 = vld [vmem:[%s8 + $0x8] sm:$0xff]
    %v1971 = vld [vmem:[%s8 + $0x10] sm:$0xff]
    %v1972 = vld [vmem:[%s8 + $0x18] sm:$0xff]
    %v1973 = vld [vmem:[%s8 + $0x20] sm:$0xff]
    %v1974 = vld [vmem:[%s8 + $0x28] sm:$0xff]
    %v1975 = vld [vmem:[%s8 + $0x30] sm:$0xff]
    %v1976 = vld [vmem:[%s8 + $0x38] sm:$0xff]
    %v1977 = vld [vmem:[%s8 + $0x40] sm:$0xff]
    %v1978 = vld [vmem:[%s8 + $0x48] sm:$0xff]
    %v1979 = vld [vmem:[%s8 + $0x50] sm:$0xff]
    %v1980 = vld [vmem:[%s8 + $0x58] sm:$0xff]
    %v1981 = vld [vmem:[%s8 + $0x60] sm:$0xff]
    %v1982 = vld [vmem:[%s8 + $0x68] sm:$0xff]
    %v1983 = vld [vmem:[%s8 + $0x70] sm:$0xff]
    %v1984 = vld [vmem:[%s8 + $0x78] sm:$0xff]
    %v2001 = vunpack.c.l.b16 %v1969
    %v2002 = vunpack.c.h.b16 %v1969
    %v2003 = vunpack.c.l.b16 %v1970
    %v2004 = vunpack.c.h.b16 %v1970
    %v2005 = vunpack.c.l.b16 %v1971
    %v2006 = vunpack.c.h.b16 %v1971
    %v2007 = vunpack.c.l.b16 %v1972
    %v2008 = vunpack.c.h.b16 %v1972
    %v2009 = vunpack.c.l.b16 %v1973
    %v2010 = vunpack.c.h.b16 %v1973
    %v2011 = vunpack.c.l.b16 %v1974
    %v2012 = vunpack.c.h.b16 %v1974
    %v2013 = vunpack.c.l.b16 %v1975
    %v2014 = vunpack.c.h.b16 %v1975
    %v2015 = vunpack.c.l.b16 %v1976
    %v2016 = vunpack.c.h.b16 %v1976
    %v2017 = vunpack.c.l.b16 %v1977
    %v2018 = vunpack.c.h.b16 %v1977
    %v2019 = vunpack.c.l.b16 %v1978
    %v2020 = vunpack.c.h.b16 %v1978
    %v2021 = vunpack.c.l.b16 %v1979
    %v2022 = vunpack.c.h.b16 %v1979
    %v2023 = vunpack.c.l.b16 %v1980
    %v2024 = vunpack.c.h.b16 %v1980
    %v2025 = vunpack.c.l.b16 %v1981
    %v2026 = vunpack.c.h.b16 %v1981
    %v2027 = vunpack.c.l.b16 %v1982
    %v2028 = vunpack.c.h.b16 %v1982
    %v2029 = vunpack.c.l.b16 %v1983
    %v2030 = vunpack.c.h.b16 %v1983
    %v2031 = vunpack.c.l.b16 %v1984
    %v2032 = vunpack.c.h.b16 %v1984
    %v2033 = vpack.c.b16 %v2003, %v2001
    %v2034 = vpack.c.b16 %v2004, %v2002
    %v2035 = vpack.c.b16 %v2007, %v2005
    %v2036 = vpack.c.b16 %v2008, %v2006
    %v2037 = vpack.c.b16 %v2011, %v2009
    %v2038 = vpack.c.b16 %v2012, %v2010
    %v2039 = vpack.c.b16 %v2015, %v2013
    %v2040 = vpack.c.b16 %v2016, %v2014
    %v2041 = vpack.c.b16 %v2019, %v2017
    %v2042 = vpack.c.b16 %v2020, %v2018
    %v2043 = vpack.c.b16 %v2023, %v2021
    %v2044 = vpack.c.b16 %v2024, %v2022
    %v2045 = vpack.c.b16 %v2027, %v2025
    %v2046 = vpack.c.b16 %v2028, %v2026
    %v2047 = vpack.c.b16 %v2031, %v2029
    %v2048 = vpack.c.b16 %v2032, %v2030
    %2065 = vmatpush.bf16.msra.mxu0 %v2047
    %2066 = vmatpush.bf16.msra.mxu0 %v2045
    %2067 = vmatpush.bf16.msra.mxu0 %v2043
    %2068 = vmatpush.bf16.msra.mxu0 %v2041
    %2069 = vmatpush.bf16.msra.mxu0 %v2039
    %2070 = vmatpush.bf16.msra.mxu0 %v2037
    %2071 = vmatpush.bf16.msra.mxu0 %v2035
    %2072 = vmatpush.bf16.msra.mxu0 %v2033
    %2073 = vmatmul.bf16.gmra.mxu0 %v1967
    %v2074 = vpop.f32.mrf.mxu0
    %v2075 = vadd.f32 0.0, %v2074
    %v2076 = vpop.f32.mrf.mxu0
    %v2077 = vadd.f32 0.0, %v2076
    %2078 = vmatmul.bf16.gmra.mxu0 %v1968
    %v2079 = vpop.f32.mrf.mxu0
    %v2080 = vadd.f32 0.0, %v2079
    %v2081 = vpop.f32.mrf.mxu0
    %v2082 = vadd.f32 0.0, %v2081
    %2083 = vdwg.mxu0
    %2084 = vmatpush.bf16.msra.mxu0 %v2048
    %2085 = vmatpush.bf16.msra.mxu0 %v2046
    %2086 = vmatpush.bf16.msra.mxu0 %v2044
    %2087 = vmatpush.bf16.msra.mxu0 %v2042
    %2088 = vmatpush.bf16.msra.mxu0 %v2040
    %2089 = vmatpush.bf16.msra.mxu0 %v2038
    %2090 = vmatpush.bf16.msra.mxu0 %v2036
    %2091 = vmatpush.bf16.msra.mxu0 %v2034
    %2092 = vmatmul.bf16.gmra.mxu0 %v1967
    %v2093 = vpop.f32.mrf.mxu0
    %v2094 = vadd.f32 0.0, %v2093
    %v2095 = vpop.f32.mrf.mxu0
    %v2096 = vadd.f32 0.0, %v2095
    %2097 = vmatmul.bf16.gmra.mxu0 %v1968
    %v2098 = vpop.f32.mrf.mxu0
    %v2099 = vadd.f32 0.0, %v2098
    %v2100 = vpop.f32.mrf.mxu0
    %v2101 = vadd.f32 0.0, %v2100
    %2102 = vdwg.mxu0
    %v2103 = vmax.f32 %v2075, 0.0
    %v2104 = vmax.f32 %v2094, 0.0
    %v2105 = vmax.f32 %v2077, 0.0
    %v2106 = vmax.f32 %v2096, 0.0
    %v2107 = vmax.f32 %v2080, 0.0
    %v2108 = vmax.f32 %v2099, 0.0
    %v2109 = vmax.f32 %v2082, 0.0
    %v2110 = vmax.f32 %v2101, 0.0
    %v2111 = vpack.c.bf16 %v2105, %v2103
    %v2112 = vpack.c.bf16 %v2106, %v2104
    %v2113 = vpack.c.bf16 %v2109, %v2107
    %v2114 = vpack.c.bf16 %v2110, %v2108
    %v2115 = vld [vmem:[%s9] sm:$0xf]
    %v2116 = vld [vmem:[%s9 + $0x4] sm:$0xf]
    %v2117 = vld [vmem:[%s9 + $0x8] sm:$0xf]
    %v2118 = vld [vmem:[%s9 + $0xc] sm:$0xf]
    %v2119 = vld [vmem:[%s9 + $0x10] sm:$0xf]
    %v2120 = vld [vmem:[%s9 + $0x14] sm:$0xf]
    %v2121 = vld [vmem:[%s9 + $0x18] sm:$0xf]
    %v2122 = vld [vmem:[%s9 + $0x1c] sm:$0xf]
    %v2123 = vld [vmem:[%s9 + $0x20] sm:$0xf]
    %v2124 = vld [vmem:[%s9 + $0x24] sm:$0xf]
    %v2125 = vld [vmem:[%s9 + $0x28] sm:$0xf]
    %v2126 = vld [vmem:[%s9 + $0x2c] sm:$0xf]
    %v2127 = vld [vmem:[%s9 + $0x30] sm:$0xf]
    %v2128 = vld [vmem:[%s9 + $0x34] sm:$0xf]
    %v2129 = vld [vmem:[%s9 + $0x38] sm:$0xf]
    %v2130 = vld [vmem:[%s9 + $0x3c] sm:$0xf]
    %v2131 = vld [vmem:[%s9 + $0x40] sm:$0xf]
    %v2132 = vld [vmem:[%s9 + $0x44] sm:$0xf]
    %v2133 = vld [vmem:[%s9 + $0x48] sm:$0xf]
    %v2134 = vld [vmem:[%s9 + $0x4c] sm:$0xf]
    %v2135 = vld [vmem:[%s9 + $0x50] sm:$0xf]
    %v2136 = vld [vmem:[%s9 + $0x54] sm:$0xf]
    %v2137 = vld [vmem:[%s9 + $0x58] sm:$0xf]
    %v2138 = vld [vmem:[%s9 + $0x5c] sm:$0xf]
    %v2139 = vld [vmem:[%s9 + $0x60] sm:$0xf]
    %v2140 = vld [vmem:[%s9 + $0x64] sm:$0xf]
    %v2141 = vld [vmem:[%s9 + $0x68] sm:$0xf]
    %v2142 = vld [vmem:[%s9 + $0x6c] sm:$0xf]
    %v2143 = vld [vmem:[%s9 + $0x70] sm:$0xf]
    %v2144 = vld [vmem:[%s9 + $0x74] sm:$0xf]
    %v2145 = vld [vmem:[%s9 + $0x78] sm:$0xf]
    %v2146 = vld [vmem:[%s9 + $0x7c] sm:$0xf]
    %v2179 = vunpack.c.l.b16 %v2115
    %v2180 = vunpack.c.l.b16 %v2116
    %v2181 = vunpack.c.l.b16 %v2117
    %v2182 = vunpack.c.l.b16 %v2118
    %v2183 = vunpack.c.l.b16 %v2119
    %v2184 = vunpack.c.l.b16 %v2120
    %v2185 = vunpack.c.l.b16 %v2121
    %v2186 = vunpack.c.l.b16 %v2122
    %v2187 = vunpack.c.l.b16 %v2123
    %v2188 = vunpack.c.l.b16 %v2124
    %v2189 = vunpack.c.l.b16 %v2125
    %v2190 = vunpack.c.l.b16 %v2126
    %v2191 = vunpack.c.l.b16 %v2127
    %v2192 = vunpack.c.l.b16 %v2128
    %v2193 = vunpack.c.l.b16 %v2129
    %v2194 = vunpack.c.l.b16 %v2130
    %v2195 = vunpack.c.l.b16 %v2131
    %v2196 = vunpack.c.l.b16 %v2132
    %v2197 = vunpack.c.l.b16 %v2133
    %v2198 = vunpack.c.l.b16 %v2134
    %v2199 = vunpack.c.l.b16 %v2135
    %v2200 = vunpack.c.l.b16 %v2136
    %v2201 = vunpack.c.l.b16 %v2137
    %v2202 = vunpack.c.l.b16 %v2138
    %v2203 = vunpack.c.l.b16 %v2139
    %v2204 = vunpack.c.l.b16 %v2140
    %v2205 = vunpack.c.l.b16 %v2141
    %v2206 = vunpack.c.l.b16 %v2142
    %v2207 = vunpack.c.l.b16 %v2143
    %v2208 = vunpack.c.l.b16 %v2144
    %v2209 = vunpack.c.l.b16 %v2145
    %v2210 = vunpack.c.l.b16 %v2146
    %v2211 = vpack.c.b16 %v2180, %v2179
    %v2212 = vpack.c.b16 %v2182, %v2181
    %v2213 = vpack.c.b16 %v2184, %v2183
    %v2214 = vpack.c.b16 %v2186, %v2185
    %v2215 = vpack.c.b16 %v2188, %v2187
    %v2216 = vpack.c.b16 %v2190, %v2189
    %v2217 = vpack.c.b16 %v2192, %v2191
    %v2218 = vpack.c.b16 %v2194, %v2193
    %v2219 = vpack.c.b16 %v2196, %v2195
    %v2220 = vpack.c.b16 %v2198, %v2197
    %v2221 = vpack.c.b16 %v2200, %v2199
    %v2222 = vpack.c.b16 %v2202, %v2201
    %v2223 = vpack.c.b16 %v2204, %v2203
    %v2224 = vpack.c.b16 %v2206, %v2205
    %v2225 = vpack.c.b16 %v2208, %v2207
    %v2226 = vpack.c.b16 %v2210, %v2209
    %2243 = vmatpush.bf16.msra.mxu0 %v2218
    %2244 = vmatpush.bf16.msra.mxu0 %v2217
    %2245 = vmatpush.bf16.msra.mxu0 %v2216
    %2246 = vmatpush.bf16.msra.mxu0 %v2215
    %2247 = vmatpush.bf16.msra.mxu0 %v2214
    %2248 = vmatpush.bf16.msra.mxu0 %v2213
    %2249 = vmatpush.bf16.msra.mxu0 %v2212
    %2250 = vmatpush.bf16.msra.mxu0 %v2211
    %2251 = vmatmul.bf16.gmra.mxu0 %v2111
    %v2252 = vpop.f32.mrf.mxu0
    %v2253 = vadd.f32 0.0, %v2252
    %v2254 = vpop.f32.mrf.mxu0
    %v2255 = vadd.f32 0.0, %v2254
    %2256 = vmatmul.bf16.gmra.mxu0 %v2113
    %v2257 = vpop.f32.mrf.mxu0
    %v2258 = vadd.f32 0.0, %v2257
    %v2259 = vpop.f32.mrf.mxu0
    %v2260 = vadd.f32 0.0, %v2259
    %2261 = vdwg.mxu0
    %2262 = vmatpush.bf16.msra.mxu0 %v2226
    %2263 = vmatpush.bf16.msra.mxu0 %v2225
    %2264 = vmatpush.bf16.msra.mxu0 %v2224
    %2265 = vmatpush.bf16.msra.mxu0 %v2223
    %2266 = vmatpush.bf16.msra.mxu0 %v2222
    %2267 = vmatpush.bf16.msra.mxu0 %v2221
    %2268 = vmatpush.bf16.msra.mxu0 %v2220
    %2269 = vmatpush.bf16.msra.mxu0 %v2219
    %2270 = vmatmul.bf16.gmra.mxu0 %v2112
    %v2271 = vpop.f32.mrf.mxu0
    %v2272 = vadd.f32 %v2253, %v2271
    %v2273 = vpop.f32.mrf.mxu0
    %v2274 = vadd.f32 %v2255, %v2273
    %2275 = vmatmul.bf16.gmra.mxu0 %v2114
    %v2276 = vpop.f32.mrf.mxu0
    %v2277 = vadd.f32 %v2258, %v2276
    %v2278 = vpop.f32.mrf.mxu0
    %v2279 = vadd.f32 %v2260, %v2278
    %2280 = vdwg.mxu0
    %v2281 = vadd.f32 %v1963, %v2272
    %v2282 = vadd.f32 %v1964, %v2274
    %v2283 = vadd.f32 %v1965, %v2277
    %v2284 = vadd.f32 %v1966, %v2279
    %v2285 = vld [vmem:[%s10] sm:$0x1]
    %v2286 = vld [vmem:[%s11] sm:$0x1]
    %2287 = vadd.xlane.f32.xlu0 %v2281
    %v2288 = vpop.xlane.xlu0 %2287
    %2289 = vadd.xlane.f32.xlu0 %v2282
    %v2290 = vpop.xlane.xlu0 %2289
    %2291 = vadd.xlane.f32.xlu0 %v2283
    %v2292 = vpop.xlane.xlu0 %2291
    %2293 = vadd.xlane.f32.xlu0 %v2284
    %v2294 = vpop.xlane.xlu0 %2293
    %v2295 = vmul.f32 %v2288, %v1872
    %v2296 = vmul.f32 %v2290, %v1872
    %v2297 = vmul.f32 %v2292, %v1872
    %v2298 = vmul.f32 %v2294, %v1872
    %v2299 = vmul.f32 %v2281, %v2281
    %v2300 = vmul.f32 %v2282, %v2282
    %v2301 = vmul.f32 %v2283, %v2283
    %v2302 = vmul.f32 %v2284, %v2284
    %2303 = vadd.xlane.f32.xlu0 %v2299
    %v2304 = vpop.xlane.xlu0 %2303
    %2305 = vadd.xlane.f32.xlu0 %v2300
    %v2306 = vpop.xlane.xlu0 %2305
    %2307 = vadd.xlane.f32.xlu0 %v2301
    %v2308 = vpop.xlane.xlu0 %2307
    %2309 = vadd.xlane.f32.xlu0 %v2302
    %v2310 = vpop.xlane.xlu0 %2309
    %v2311 = vmul.f32 %v2304, %v1872
    %v2312 = vmul.f32 %v2306, %v1872
    %v2313 = vmul.f32 %v2308, %v1872
    %v2314 = vmul.f32 %v2310, %v1872
    %v2315 = vmul.f32 %v2295, %v2295
    %v2316 = vmul.f32 %v2296, %v2296
    %v2317 = vmul.f32 %v2297, %v2297
    %v2318 = vmul.f32 %v2298, %v2298
    %v2319 = vsub.f32 %v2311, %v2315
    %v2320 = vsub.f32 %v2312, %v2316
    %v2321 = vsub.f32 %v2313, %v2317
    %v2322 = vsub.f32 %v2314, %v2318
    %v2323 = vadd.f32 %v2319, 1e-05
    %v2324 = vadd.f32 %v2320, 1e-05
    %v2325 = vadd.f32 %v2321, 1e-05
    %v2326 = vadd.f32 %v2322, 1e-05
    %v2327 = vrsqrt.pop %v2323
    %v2328 = vmul.f32 %v2327, %v2323
    %v2329 = vmul.f32 %v2328, %v2327
    %v2330 = vmul.f32 0.5, %v2329
    %v2331 = vsub.f32 1.5, %v2330
    %v2332 = vmul.f32 %v2327, %v2331
    %vm2333 = vweird.f32 %v2323
    %vm2334 = vweird.f32 %v2327
    %vm2335 = vmor %vm2333, %vm2334
    %v2336 = vsel %vm2335, %v2327, %v2332
    %v2337 = vrsqrt.pop %v2324
    %v2338 = vmul.f32 %v2337, %v2324
    %v2339 = vmul.f32 %v2338, %v2337
    %v2340 = vmul.f32 0.5, %v2339
    %v2341 = vsub.f32 1.5, %v2340
    %v2342 = vmul.f32 %v2337, %v2341
    %vm2343 = vweird.f32 %v2324
    %vm2344 = vweird.f32 %v2337
    %vm2345 = vmor %vm2343, %vm2344
    %v2346 = vsel %vm2345, %v2337, %v2342
    %v2347 = vrsqrt.pop %v2325
    %v2348 = vmul.f32 %v2347, %v2325
    %v2349 = vmul.f32 %v2348, %v2347
    %v2350 = vmul.f32 0.5, %v2349
    %v2351 = vsub.f32 1.5, %v2350
    %v2352 = vmul.f32 %v2347, %v2351
    %vm2353 = vweird.f32 %v2325
    %vm2354 = vweird.f32 %v2347
    %vm2355 = vmor %vm2353, %vm2354
    %v2356 = vsel %vm2355, %v2347, %v2352
    %v2357 = vrsqrt.pop %v2326
    %v2358 = vmul.f32 %v2357, %v2326
    %v2359 = vmul.f32 %v2358, %v2357
    %v2360 = vmul.f32 0.5, %v2359
    %v2361 = vsub.f32 1.5, %v2360
    %v2362 = vmul.f32 %v2357, %v2361
    %vm2363 = vweird.f32 %v2326
    %vm2364 = vweird.f32 %v2357
    %vm2365 = vmor %vm2363, %vm2364
    %v2366 = vsel %vm2365, %v2357, %v2362
    %v2367 = vsub.f32 %v2281, %v2295
    %v2368 = vsub.f32 %v2282, %v2296
    %v2369 = vsub.f32 %v2283, %v2297
    %v2370 = vsub.f32 %v2284, %v2298
    %v2371 = vmul.f32 %v2367, %v2336
    %v2372 = vmul.f32 %v2368, %v2346
    %v2373 = vmul.f32 %v2369, %v2356
    %v2374 = vmul.f32 %v2370, %v2366
    %v2376 = vperm.slane %v2285, 0
    %v2378 = vmul.f32 %v2371, %v2376
    %v2379 = vmul.f32 %v2372, %v2376
    %v2380 = vmul.f32 %v2373, %v2376
    %v2381 = vmul.f32 %v2374, %v2376
    %v2383 = vperm.slane %v2286, 0
    %v2385 = vadd.f32 %v2378, %v2383
    %v2386 = vadd.f32 %v2379, %v2383
    %v2387 = vadd.f32 %v2380, %v2383
    %v2388 = vadd.f32 %v2381, %v2383
    %2389 = vst [vmem:[#allocation2] sm:$0xff] %v2385
    %2390 = vst [vmem:[#allocation2 + $0x8] sm:$0xff] %v2386
    %2391 = vst [vmem:[#allocation2 + $0x10] sm:$0xff] %v2387
    %2392 = vst [vmem:[#allocation2 + $0x18] sm:$0xff] %v2388
    // Predicated region
    $region50: #{decode_layer.1} parent=1 // pred_check
      _
    $region51: #{decode_layer.1} parent=1 // pred_check_branch
      %2394 = sbr.rel (0) target = $region53
    $region52: #{decode_layer.1} parent=1 // pred_region
      %2396 = vsyncadd [#allocation3], 0
      %s2397 = sshll.u32 [#allocation2], 4
      %s2398 = int_to_ptr.vmem [resolvable:$true] %s2397
      %s2399 = sshll.u32 %s12, 4
      %s2400 = int_to_ptr.hbm [resolvable:$true] %s2399
      %2405 = dma.vmem_to_hbm [thread:$0]  %s2398, 512, %s2400, [#allocation3], 128, 128, 8
    $region53: #{decode_layer.1} parent=1 // pred_fallthru
      _
    // Predicated region
    $region54: #{decode_layer.1} parent=1 // pred_check
      _
    $region55: #{decode_layer.1} parent=1 // pred_check_branch
      %2407 = sbr.rel (0) target = $region57
    $region56: #{decode_layer.1} parent=1 // pred_region
      _
    $region57: #{decode_layer.1} parent=1 // pred_fallthru
      _
    // Predicated region
    $region58: #{decode_layer.1} parent=1 // pred_check
      _
    $region59: #{decode_layer.1} parent=1 // pred_check_branch
      %2409 = sbr.rel (0) target = $region61
    $region60: #{decode_layer.1} parent=1 // pred_region
      %2411 = dma.done [#allocation3], 512
    $region61: #{decode_layer.1} parent=1 // pred_fallthru
      _
    // Predicated region
    $region62: #{decode_layer.1} parent=1 // pred_check
      _
    $region63: #{decode_layer.1} parent=1 // pred_check_branch
      %2413 = sbr.rel (0) target = $region65
    $region64: #{decode_layer.1} parent=1 // pred_region
      _
    $region65: #{decode_layer.1} parent=1 // pred_fallthru
      _
    %2414 = vsyncpa [#allocation3], 1

</llo_original>
